<compile_context>
chip_gen: v7x
topology: tpu7x:2x2x1
jax: 0.10.0
libtpu: 0.0.40
codegen_flags: <defaults>
</compile_context>

<pallas_src>
import functools

import jax
import jax.numpy as jnp
from jax.experimental import pallas as pl
from jax.experimental.pallas import tpu as pltpu

_VMEM_LIMIT = 48 * 1024 * 1024   # < v7x's 64 MiB physical VMEM; fine on v5e/v6e


# ---------------------------------------------------------------------------
# Kernel A: depthwise 3x3 + fused (block-diagonal) pointwise 1x1 -> q, k, v
# ---------------------------------------------------------------------------
def _cvt_qkv_kernel(xp_ref, dw3_ref, w3_ref, q_ref, k_ref, v_ref,
                    *, img_h: int, img_w: int):
    # xp_ref : (1, H+2, W+2, C) bf16   zero-padded channels-last input
    # dw3_ref: (9, 3C)          f32    depthwise taps, [q|k|v] along channels
    # w3_ref : (3C, 3C)         bf16   block-diag pointwise weights (scale in q)
    # q/k/v_ref: (1, N, C)      bf16
    C = q_ref.shape[-1]
    C3 = 3 * C
    N = img_h * img_w

    xp = xp_ref[0].astype(jnp.float32)                       # (H+2, W+2, C)
    # Tile channels 3x so one accumulator / one FMA per tap serves q, k and v.
    xp3 = jnp.concatenate([xp, xp, xp], axis=-1)             # (H+2, W+2, 3C)

    acc = jnp.zeros((img_h, img_w, C3), jnp.float32)
    for kk in range(9):                                      # 3x3, stride 1, pad 1
        dh, dw = kk // 3, kk % 3
        acc = acc + xp3[dh:dh + img_h, dw:dw + img_w, :] * dw3_ref[kk]

    # NOTE: this reshape is only free when img_w is a multiple of 8 (sublane).
    d3 = acc.reshape(N, C3).astype(jnp.bfloat16)             # [dq | dk | dv]

    # One fused MXU matmul (block-diagonal weight) => [q*scale | k | v].
    qkv = jnp.dot(d3, w3_ref[...], preferred_element_type=jnp.float32)

    q_ref[0] = qkv[:, 0:C].astype(q_ref.dtype)
    k_ref[0] = qkv[:, C:2 * C].astype(k_ref.dtype)
    v_ref[0] = qkv[:, 2 * C:3 * C].astype(v_ref.dtype)


# ---------------------------------------------------------------------------
# Kernel B: flash-style multi-head attention + fused head-merge / to_out
# ---------------------------------------------------------------------------
def _cvt_attn_kernel(q_ref, k_ref, v_ref, wo_ref, bo_ref, out_ref,
                     *, num_heads: int):
    # q_ref  : (1, Tq, C) bf16  (1/sqrt(Dh) already folded into q)
    # k_ref  : (1, N,  C) bf16
    # v_ref  : (1, N,  C) bf16
    # wo_ref : (C, C)     bf16  to_out weight (Cin, Cout)
    # bo_ref : (1, C)     f32   to_out bias
    # out_ref: (1, Tq, C) f32
    C = q_ref.shape[-1]
    Dh = C // num_heads
    bf16 = jnp.bfloat16

    q = q_ref[0]                                             # (Tq, C)
    k = k_ref[0]                                             # (N, C)
    v = v_ref[0]

    ctx_parts = []
    for h in range(num_heads):
        lo = h * Dh
        qh = q[:, lo:lo + Dh]                                # (Tq, Dh) bf16
        kh = k[:, lo:lo + Dh]                                # (N, Dh)  bf16
        vh = v[:, lo:lo + Dh]

        # scores: contract Dh of q and k directly (q @ k^T), f32 accumulate.
        s = jax.lax.dot_general(qh, kh, (((1,), (1,)), ((), ())),
                                preferred_element_type=jnp.float32)  # (Tq, N)
        s = s - jnp.max(s, axis=-1, keepdims=True)
        p = jnp.exp(s)                                       # unnormalized probs
        l = jnp.sum(p, axis=-1, keepdims=True)               # (Tq, 1)

        ctx = jnp.dot(p.astype(bf16), vh,
                      preferred_element_type=jnp.float32)    # (Tq, Dh)
        # Deferred softmax normalization: exact reciprocal on the small ctx.
        ctx_parts.append(ctx * pl.reciprocal(l))

    ctx = jnp.concatenate(ctx_parts, axis=-1)                # (Tq, C), heads merged

    # Fused head-merge + to_out 1x1 conv: ONE C-deep GEMM + bias.
    out = jnp.dot(ctx.astype(bf16), wo_ref[...],
                  preferred_element_type=jnp.float32) + bo_ref[0]
    out_ref[0] = out.astype(out_ref.dtype)


# ---------------------------------------------------------------------------
# Wrapper
# ---------------------------------------------------------------------------
def _pick_q_tile(n: int, target: int = 512) -> int:
    """Largest divisor of n that is <= target and a multiple of 8, else n."""
    if n <= target:
        return n
    for t in range(target, 7, -1):
        if n % t == 0 and t % 8 == 0:
            return t
    return n


def cvt_attention(x, params, *, num_heads: int):
    """x: (B, C, H, W) float32 -> (B, C, H, W), like the PyTorch module."""
    B, C, H, W = x.shape
    assert C % num_heads == 0
    N = H * W
    C3 = 3 * C

    # NCHW -> channels-last, zero-pad the spatial dims for the 3x3/pad-1
    # depthwise convs, DMA in bf16 (halves the only per-step HBM read).
    xcl = jnp.transpose(x, (0, 2, 3, 1))
    xp = jnp.pad(xcl, ((0, 0), (1, 1), (1, 1), (0, 0))).astype(jnp.bfloat16)

    # ---------------- Kernel A: q/k/v projections ----------------
    qkv_cost = pl.CostEstimate(
        flops=int(B * (2 * 9 * N * C3 + 2 * N * C3 * C3)),
        transcendentals=0,
        bytes_accessed=int(xp.size * 2 + 9 * C3 * 4 + C3 * C3 * 2
                           + 3 * B * N * C * 2))
    q, k, v = pl.pallas_call(
        functools.partial(_cvt_qkv_kernel, img_h=H, img_w=W),
        out_shape=[jax.ShapeDtypeStruct((B, N, C), jnp.bfloat16)] * 3,
        grid_spec=pltpu.PrefetchScalarGridSpec(
            num_scalar_prefetch=0,
            grid=(B,),
            in_specs=[
                pl.BlockSpec((1, H + 2, W + 2, C), lambda b: (b, 0, 0, 0)),
                pl.BlockSpec((9, C3), lambda b: (0, 0)),
                pl.BlockSpec((C3, C3), lambda b: (0, 0)),
            ],
            out_specs=[pl.BlockSpec((1, N, C), lambda b: (b, 0, 0))] * 3,
        ),
        compiler_params=pltpu.CompilerParams(
            dimension_semantics=("parallel",),
            vmem_limit_bytes=_VMEM_LIMIT),
        cost_estimate=qkv_cost,
    )(xp, params['dw3'], params['w3'])

    # ---------------- Kernel B: attention ----------------
    Tq = _pick_q_tile(N)
    n_q = N // Tq
    attn_cost = pl.CostEstimate(
        flops=int(B * (4 * N * N * C + 2 * N * C * C)),
        transcendentals=int(B * num_heads * N * N),
        bytes_accessed=int(B * N * C * 2 * (1 + 2 * n_q) + C * C * 2 + C * 4
                           + B * N * C * 4))
    out = pl.pallas_call(
        functools.partial(_cvt_attn_kernel, num_heads=num_heads),
        out_shape=jax.ShapeDtypeStruct((B, N, C), jnp.float32),
        grid_spec=pltpu.PrefetchScalarGridSpec(
            num_scalar_prefetch=0,
            grid=(B, n_q),
            in_specs=[
                pl.BlockSpec((1, Tq, C), lambda b, qi: (b, qi, 0)),
                pl.BlockSpec((1, N, C), lambda b, qi: (b, 0, 0)),
                pl.BlockSpec((1, N, C), lambda b, qi: (b, 0, 0)),
                pl.BlockSpec((C, C), lambda b, qi: (0, 0)),
                pl.BlockSpec((1, C), lambda b, qi: (0, 0)),
            ],
            out_specs=pl.BlockSpec((1, Tq, C), lambda b, qi: (b, qi, 0)),
        ),
        compiler_params=pltpu.CompilerParams(
            dimension_semantics=("parallel", "parallel"),
            vmem_limit_bytes=_VMEM_LIMIT),
        cost_estimate=attn_cost,
    )(q, k, v, params['wo'], params['bo'])

    # (B, N, C) -> (B, C, H, W)
    return jnp.transpose(out.reshape(B, H, W, C), (0, 3, 1, 2)).astype(x.dtype)


# ---------------------------------------------------------------------------
# Parameters (PyTorch layouts) + packing into kernel layouts
# ---------------------------------------------------------------------------
def init_params(key, embed_dim: int):
    """Raw weights in PyTorch layouts (f32)."""
    C = embed_dim
    ks = jax.random.split(key, 8)
    s = 0.02
    return {
        'dwq': jax.random.normal(ks[0], (C, 1, 3, 3), jnp.float32) * s,
        'dwk': jax.random.normal(ks[1], (C, 1, 3, 3), jnp.float32) * s,
        'dwv': jax.random.normal(ks[2], (C, 1, 3, 3), jnp.float32) * s,
        'pwq': jax.random.normal(ks[3], (C, C), jnp.float32) * s,   # (Cout, Cin)
        'pwk': jax.random.normal(ks[4], (C, C), jnp.float32) * s,
        'pwv': jax.random.normal(ks[5], (C, C), jnp.float32) * s,
        'wo':  jax.random.normal(ks[6], (C, C), jnp.float32) * s,   # (Cout, Cin)
        'bo':  jax.random.normal(ks[7], (C,), jnp.float32) * s,
    }


def pack_params(raw, embed_dim: int, num_heads: int):
    """Convert PyTorch-layout weights into the layouts the kernels consume."""
    C = embed_dim
    scale = (C // num_heads) ** -0.5

    def dw_flat(w):                       # (C,1,3,3) -> (9, C), tap = 3*i + j
        return jnp.transpose(w.reshape(C, 9), (1, 0))

    dw3 = jnp.concatenate([dw_flat(raw['dwq']), dw_flat(raw['dwk']),
                           dw_flat(raw['dwv'])], axis=-1)            # (9, 3C)

    # Block-diagonal fused pointwise weight; 1/sqrt(Dh) folded into q columns.
    w3 = jnp.zeros((3 * C, 3 * C), jnp.float32)
    w3 = w3.at[0:C, 0:C].set(raw['pwq'].T * scale)
    w3 = w3.at[C:2 * C, C:2 * C].set(raw['pwk'].T)
    w3 = w3.at[2 * C:, 2 * C:].set(raw['pwv'].T)

    return {
        'dw3': dw3.astype(jnp.float32),
        'w3': w3.astype(jnp.bfloat16),
        'wo': raw['wo'].T.astype(jnp.bfloat16),                     # (Cin, Cout)
        'bo': raw['bo'].reshape(1, C).astype(jnp.float32),
    }


# ---------------------------------------------------------------------------
# Pure JAX/XLA f32 reference mirroring the PyTorch module
# ---------------------------------------------------------------------------
def cvt_attention_ref(x, raw, *, num_heads: int):
    B, C, H, W = x.shape
    N = H * W
    Dh = C // num_heads
    scale = Dh ** -0.5

    def depth_separable(xin, dw, pw):      # dw (C,1,3,3), pw (Cout, Cin)
        y = jax.lax.conv_general_dilated(
            xin, dw, window_strides=(1, 1), padding='SAME',
            feature_group_count=C,
            dimension_numbers=('NCHW', 'OIHW', 'NCHW'))
        return jnp.einsum('bchw,dc->bdhw', y, pw)

    q = depth_separable(x, raw['dwq'], raw['pwq'])
    k = depth_separable(x, raw['dwk'], raw['pwk'])
    v = depth_separable(x, raw['dwv'], raw['pwv'])

    def heads(t):                          # (B,C,H,W) -> (B,h,N,Dh)
        return t.reshape(B, num_heads, Dh, N).transpose(0, 1, 3, 2)

    qh, kh, vh = heads(q), heads(k), heads(v)
    s = jnp.einsum('bhnd,bhmd->bhnm', qh, kh) * scale
    a = jax.nn.softmax(s, axis=-1)
    o = jnp.einsum('bhnm,bhmd->bhnd', a, vh)
    o = o.transpose(0, 1, 3, 2).reshape(B, C, H, W)
    out = jnp.einsum('bchw,dc->bdhw', o, raw['wo'])
    return out + raw['bo'][None, :, None, None]


if __name__ == "__main__":
    B, C, Himg, Wimg = 2, 64, 8, 8        # embed_dim=64, 8 heads, 8x8 feature map
    num_heads = 8

    key = jax.random.PRNGKey(0)
    kx, kp = jax.random.split(key)
    x = jax.random.normal(kx, (B, C, Himg, Wimg), jnp.float32)

    raw = init_params(kp, C)
    params = pack_params(raw, C, num_heads)

    out = cvt_attention(x, params, num_heads=num_heads)
    out = jax.block_until_ready(out)

    ref = cvt_attention_ref(x, raw, num_heads=num_heads)
    assert out.shape == (B, C, Himg, Wimg)
    err = float(jnp.max(jnp.abs(out - ref)))
    assert jnp.allclose(out, ref, atol=2e-3, rtol=2e-2), err

    print("KERNEL_OK")
</pallas_src>

<mosaic_0001>
module attributes {stable_mosaic.version = 11 : i64} {
  func.func @_cvt_qkv_kernel(%arg0: i32, %arg1: memref<1x10x10x64xbf16, #tpu.memory_space<vmem>>, %arg2: memref<9x192xf32, #tpu.memory_space<vmem>>, %arg3: memref<192x192xbf16, #tpu.memory_space<vmem>>, %arg4: memref<1x64x64xbf16, #tpu.memory_space<vmem>>, %arg5: memref<1x64x64xbf16, #tpu.memory_space<vmem>>, %arg6: memref<1x64x64xbf16, #tpu.memory_space<vmem>>) attributes {dimension_semantics = [#tpu.dimension_semantics<parallel>], iteration_bounds = array<i64: 2>, scalar_prefetch = 0 : i64, scratch_operands = 0 : i64, tpu.core_type = #tpu.core_type<tc>, window_params = [{transform_indices = @transform_0, window_bounds = array<i64: 1, 10, 10, 64>}, {pipeline_mode = #tpu.pipeline_mode<synchronous>, transform_indices = @transform_1, window_bounds = array<i64: 9, 192>}, {pipeline_mode = #tpu.pipeline_mode<synchronous>, transform_indices = @transform_2, window_bounds = array<i64: 192, 192>}, {transform_indices = @transform_3, window_bounds = array<i64: 1, 64, 64>}, {transform_indices = @transform_4, window_bounds = array<i64: 1, 64, 64>}, {transform_indices = @transform_5, window_bounds = array<i64: 1, 64, 64>}]} {
    %c0 = arith.constant 0 : index
    %c0_0 = arith.constant 0 : index
    %c0_1 = arith.constant 0 : index
    %c0_2 = arith.constant 0 : index
    %0 = vector.load %arg1[%c0, %c0_0, %c0_1, %c0_2] : memref<1x10x10x64xbf16, #tpu.memory_space<vmem>>, vector<1x10x10x64xbf16>
    %1 = vector.shape_cast %0 : vector<1x10x10x64xbf16> to vector<10x10x64xbf16>
    %2 = arith.extf %1 : vector<10x10x64xbf16> to vector<10x10x64xf32>
    %3 = tpu.concatenate %2, %2, %2 in 2 : vector<10x10x64xf32>, vector<10x10x64xf32>, vector<10x10x64xf32> -> vector<10x10x192xf32>
    %cst = arith.constant 0.000000e+00 : f32
    %4 = vector.broadcast %cst : f32 to vector<8x8x192xf32>
    %5 = vector.extract_strided_slice %3 {offsets = [0, 0, 0], sizes = [8, 8, 192], strides = [1, 1, 1]} : vector<10x10x192xf32> to vector<8x8x192xf32>
    %c0_3 = arith.constant 0 : index
    %c0_4 = arith.constant 0 : index
    %6 = vector.load %arg2[%c0_3, %c0_4] : memref<9x192xf32, #tpu.memory_space<vmem>>, vector<1x192xf32>
    %7 = vector.shape_cast %6 : vector<1x192xf32> to vector<192xf32>
    %8 = vector.shape_cast %7 : vector<192xf32> to vector<1x1x192xf32>
    %9 = vector.broadcast %8 : vector<1x1x192xf32> to vector<8x8x192xf32>
    %10 = arith.mulf %5, %9 : vector<8x8x192xf32>
    %11 = arith.addf %4, %10 : vector<8x8x192xf32>
    %12 = vector.extract_strided_slice %3 {offsets = [0, 1, 0], sizes = [8, 8, 192], strides = [1, 1, 1]} : vector<10x10x192xf32> to vector<8x8x192xf32>
    %c1 = arith.constant 1 : index
    %c0_5 = arith.constant 0 : index
    %13 = vector.load %arg2[%c1, %c0_5] : memref<9x192xf32, #tpu.memory_space<vmem>>, vector<1x192xf32>
    %14 = vector.shape_cast %13 : vector<1x192xf32> to vector<192xf32>
    %15 = vector.shape_cast %14 : vector<192xf32> to vector<1x1x192xf32>
    %16 = vector.broadcast %15 : vector<1x1x192xf32> to vector<8x8x192xf32>
    %17 = arith.mulf %12, %16 : vector<8x8x192xf32>
    %18 = arith.addf %11, %17 : vector<8x8x192xf32>
    %19 = vector.extract_strided_slice %3 {offsets = [0, 2, 0], sizes = [8, 8, 192], strides = [1, 1, 1]} : vector<10x10x192xf32> to vector<8x8x192xf32>
    %c2 = arith.constant 2 : index
    %c0_6 = arith.constant 0 : index
    %20 = vector.load %arg2[%c2, %c0_6] : memref<9x192xf32, #tpu.memory_space<vmem>>, vector<1x192xf32>
    %21 = vector.shape_cast %20 : vector<1x192xf32> to vector<192xf32>
    %22 = vector.shape_cast %21 : vector<192xf32> to vector<1x1x192xf32>
    %23 = vector.broadcast %22 : vector<1x1x192xf32> to vector<8x8x192xf32>
    %24 = arith.mulf %19, %23 : vector<8x8x192xf32>
    %25 = arith.addf %18, %24 : vector<8x8x192xf32>
    %26 = vector.extract_strided_slice %3 {offsets = [1, 0, 0], sizes = [8, 8, 192], strides = [1, 1, 1]} : vector<10x10x192xf32> to vector<8x8x192xf32>
    %c3 = arith.constant 3 : index
    %c0_7 = arith.constant 0 : index
    %27 = vector.load %arg2[%c3, %c0_7] : memref<9x192xf32, #tpu.memory_space<vmem>>, vector<1x192xf32>
    %28 = vector.shape_cast %27 : vector<1x192xf32> to vector<192xf32>
    %29 = vector.shape_cast %28 : vector<192xf32> to vector<1x1x192xf32>
    %30 = vector.broadcast %29 : vector<1x1x192xf32> to vector<8x8x192xf32>
    %31 = arith.mulf %26, %30 : vector<8x8x192xf32>
    %32 = arith.addf %25, %31 : vector<8x8x192xf32>
    %33 = vector.extract_strided_slice %3 {offsets = [1, 1, 0], sizes = [8, 8, 192], strides = [1, 1, 1]} : vector<10x10x192xf32> to vector<8x8x192xf32>
    %c4 = arith.constant 4 : index
    %c0_8 = arith.constant 0 : index
    %34 = vector.load %arg2[%c4, %c0_8] : memref<9x192xf32, #tpu.memory_space<vmem>>, vector<1x192xf32>
    %35 = vector.shape_cast %34 : vector<1x192xf32> to vector<192xf32>
    %36 = vector.shape_cast %35 : vector<192xf32> to vector<1x1x192xf32>
    %37 = vector.broadcast %36 : vector<1x1x192xf32> to vector<8x8x192xf32>
    %38 = arith.mulf %33, %37 : vector<8x8x192xf32>
    %39 = arith.addf %32, %38 : vector<8x8x192xf32>
    %40 = vector.extract_strided_slice %3 {offsets = [1, 2, 0], sizes = [8, 8, 192], strides = [1, 1, 1]} : vector<10x10x192xf32> to vector<8x8x192xf32>
    %c5 = arith.constant 5 : index
    %c0_9 = arith.constant 0 : index
    %41 = vector.load %arg2[%c5, %c0_9] : memref<9x192xf32, #tpu.memory_space<vmem>>, vector<1x192xf32>
    %42 = vector.shape_cast %41 : vector<1x192xf32> to vector<192xf32>
    %43 = vector.shape_cast %42 : vector<192xf32> to vector<1x1x192xf32>
    %44 = vector.broadcast %43 : vector<1x1x192xf32> to vector<8x8x192xf32>
    %45 = arith.mulf %40, %44 : vector<8x8x192xf32>
    %46 = arith.addf %39, %45 : vector<8x8x192xf32>
    %47 = vector.extract_strided_slice %3 {offsets = [2, 0, 0], sizes = [8, 8, 192], strides = [1, 1, 1]} : vector<10x10x192xf32> to vector<8x8x192xf32>
    %c6 = arith.constant 6 : index
    %c0_10 = arith.constant 0 : index
    %48 = vector.load %arg2[%c6, %c0_10] : memref<9x192xf32, #tpu.memory_space<vmem>>, vector<1x192xf32>
    %49 = vector.shape_cast %48 : vector<1x192xf32> to vector<192xf32>
    %50 = vector.shape_cast %49 : vector<192xf32> to vector<1x1x192xf32>
    %51 = vector.broadcast %50 : vector<1x1x192xf32> to vector<8x8x192xf32>
    %52 = arith.mulf %47, %51 : vector<8x8x192xf32>
    %53 = arith.addf %46, %52 : vector<8x8x192xf32>
    %54 = vector.extract_strided_slice %3 {offsets = [2, 1, 0], sizes = [8, 8, 192], strides = [1, 1, 1]} : vector<10x10x192xf32> to vector<8x8x192xf32>
    %c7 = arith.constant 7 : index
    %c0_11 = arith.constant 0 : index
    %55 = vector.load %arg2[%c7, %c0_11] : memref<9x192xf32, #tpu.memory_space<vmem>>, vector<1x192xf32>
    %56 = vector.shape_cast %55 : vector<1x192xf32> to vector<192xf32>
    %57 = vector.shape_cast %56 : vector<192xf32> to vector<1x1x192xf32>
    %58 = vector.broadcast %57 : vector<1x1x192xf32> to vector<8x8x192xf32>
    %59 = arith.mulf %54, %58 : vector<8x8x192xf32>
    %60 = arith.addf %53, %59 : vector<8x8x192xf32>
    %61 = vector.extract_strided_slice %3 {offsets = [2, 2, 0], sizes = [8, 8, 192], strides = [1, 1, 1]} : vector<10x10x192xf32> to vector<8x8x192xf32>
    %c8 = arith.constant 8 : index
    %c0_12 = arith.constant 0 : index
    %62 = vector.load %arg2[%c8, %c0_12] : memref<9x192xf32, #tpu.memory_space<vmem>>, vector<1x192xf32>
    %63 = vector.shape_cast %62 : vector<1x192xf32> to vector<192xf32>
    %64 = vector.shape_cast %63 : vector<192xf32> to vector<1x1x192xf32>
    %65 = vector.broadcast %64 : vector<1x1x192xf32> to vector<8x8x192xf32>
    %66 = arith.mulf %61, %65 : vector<8x8x192xf32>
    %67 = arith.addf %60, %66 : vector<8x8x192xf32>
    %68 = vector.shape_cast %67 : vector<8x8x192xf32> to vector<64x192xf32>
    %69 = arith.truncf %68 : vector<64x192xf32> to vector<64x192xbf16>
    %c0_13 = arith.constant 0 : index
    %c0_14 = arith.constant 0 : index
    %70 = vector.load %arg3[%c0_13, %c0_14] : memref<192x192xbf16, #tpu.memory_space<vmem>>, vector<192x192xbf16>
    %cst_15 = arith.constant dense<0.000000e+00> : vector<64x192xf32>
    %71 = tpu.matmul %69, %70, %cst_15 {dimension_numbers = #tpu.dot_dimension_numbers<[1], [0], [0], [1], [0, 0, 1, 1], [], []>} : vector<64x192xbf16>, vector<192x192xbf16>, vector<64x192xf32> -> vector<64x192xf32>
    %72 = vector.extract_strided_slice %71 {offsets = [0, 0], sizes = [64, 64], strides = [1, 1]} : vector<64x192xf32> to vector<64x64xf32>
    %73 = arith.truncf %72 : vector<64x64xf32> to vector<64x64xbf16>
    %c0_16 = arith.constant 0 : index
    %c0_17 = arith.constant 0 : index
    %c0_18 = arith.constant 0 : index
    %74 = vector.load %arg4[%c0_16, %c0_17, %c0_18] : memref<1x64x64xbf16, #tpu.memory_space<vmem>>, vector<1x64x64xbf16>
    %75 = vector.shape_cast %74 : vector<1x64x64xbf16> to vector<64x64xbf16>
    %76 = vector.shape_cast %73 : vector<64x64xbf16> to vector<1x64x64xbf16>
    tpu.vector_store %arg4[%c0_16, %c0_17, %c0_18], %76 {strides = array<i32>} : memref<1x64x64xbf16, #tpu.memory_space<vmem>>, vector<1x64x64xbf16>,
    %77 = vector.extract_strided_slice %71 {offsets = [0, 64], sizes = [64, 64], strides = [1, 1]} : vector<64x192xf32> to vector<64x64xf32>
    %78 = arith.truncf %77 : vector<64x64xf32> to vector<64x64xbf16>
    %c0_19 = arith.constant 0 : index
    %c0_20 = arith.constant 0 : index
    %c0_21 = arith.constant 0 : index
    %79 = vector.load %arg5[%c0_19, %c0_20, %c0_21] : memref<1x64x64xbf16, #tpu.memory_space<vmem>>, vector<1x64x64xbf16>
    %80 = vector.shape_cast %79 : vector<1x64x64xbf16> to vector<64x64xbf16>
    %81 = vector.shape_cast %78 : vector<64x64xbf16> to vector<1x64x64xbf16>
    tpu.vector_store %arg5[%c0_19, %c0_20, %c0_21], %81 {strides = array<i32>} : memref<1x64x64xbf16, #tpu.memory_space<vmem>>, vector<1x64x64xbf16>,
    %82 = vector.extract_strided_slice %71 {offsets = [0, 128], sizes = [64, 64], strides = [1, 1]} : vector<64x192xf32> to vector<64x64xf32>
    %83 = arith.truncf %82 : vector<64x64xf32> to vector<64x64xbf16>
    %c0_22 = arith.constant 0 : index
    %c0_23 = arith.constant 0 : index
    %c0_24 = arith.constant 0 : index
    %84 = vector.load %arg6[%c0_22, %c0_23, %c0_24] : memref<1x64x64xbf16, #tpu.memory_space<vmem>>, vector<1x64x64xbf16>
    %85 = vector.shape_cast %84 : vector<1x64x64xbf16> to vector<64x64xbf16>
    %86 = vector.shape_cast %83 : vector<64x64xbf16> to vector<1x64x64xbf16>
    tpu.vector_store %arg6[%c0_22, %c0_23, %c0_24], %86 {strides = array<i32>} : memref<1x64x64xbf16, #tpu.memory_space<vmem>>, vector<1x64x64xbf16>,
    return
  }
  func.func @transform_0(%arg0: i32) -> (i32, i32, i32, i32) {
    %c0_i32 = arith.constant 0 : i32
    %c0_i32_0 = arith.constant 0 : i32
    %c0_i32_1 = arith.constant 0 : i32
    %c0_i32_2 = arith.constant 0 : i32
    return %arg0, %c0_i32, %c0_i32_0, %c0_i32_1 : i32, i32, i32, i32
  }
  func.func @transform_1(%arg0: i32) -> (i32, i32) {
    %c0_i32 = arith.constant 0 : i32
    %c0_i32_0 = arith.constant 0 : i32
    %c0_i32_1 = arith.constant 0 : i32
    return %c0_i32, %c0_i32_0 : i32, i32
  }
  func.func @transform_2(%arg0: i32) -> (i32, i32) {
    %c0_i32 = arith.constant 0 : i32
    %c0_i32_0 = arith.constant 0 : i32
    %c0_i32_1 = arith.constant 0 : i32
    return %c0_i32, %c0_i32_0 : i32, i32
  }
  func.func @transform_3(%arg0: i32) -> (i32, i32, i32) {
    %c0_i32 = arith.constant 0 : i32
    %c0_i32_0 = arith.constant 0 : i32
    %c0_i32_1 = arith.constant 0 : i32
    return %arg0, %c0_i32, %c0_i32_0 : i32, i32, i32
  }
  func.func @transform_4(%arg0: i32) -> (i32, i32, i32) {
    %c0_i32 = arith.constant 0 : i32
    %c0_i32_0 = arith.constant 0 : i32
    %c0_i32_1 = arith.constant 0 : i32
    return %arg0, %c0_i32, %c0_i32_0 : i32, i32, i32
  }
  func.func @transform_5(%arg0: i32) -> (i32, i32, i32) {
    %c0_i32 = arith.constant 0 : i32
    %c0_i32_0 = arith.constant 0 : i32
    %c0_i32_1 = arith.constant 0 : i32
    return %arg0, %c0_i32, %c0_i32_0 : i32, i32, i32
  }
}

</mosaic_0001>

<llo_original>
// kernel: tpu_custom_call.1
$region0: #{tpu_custom_call.1}
  #allocation0 [shape = 'u32[]', space=smem, size = 0x4, offset = 0x4, fixed_abs, tag = 'smem constant byte address 0x4 - core index']
  #allocation1 [shape = 'u32[144,128]{1,0:T(1,128)}', space=vmem, size = 0x12000, scoped, tag = 'internal scratch']
  %s0 = inlined_call_operand.vmem [shape: bf16[2,10,10,64], index: 0, kind: input, shape index: {}]
  %s1 = inlined_call_operand.vmem [shape: f32[9,192], index: 1, kind: input, shape index: {}]
  %s2 = inlined_call_operand.vmem [shape: bf16[192,192], index: 2, kind: input, shape index: {}]
  %s3 = inlined_call_operand.hbm [shape: bf16[2,64,64], index: 3, kind: output, shape index: {0}]
  %s4 = inlined_call_operand.hbm [shape: bf16[2,64,64], index: 4, kind: output, shape index: {1}]
  %s5 = inlined_call_operand.hbm [shape: bf16[2,64,64], index: 5, kind: output, shape index: {2}]
  %6 = xla_tuple %s3, %s4, %s5
  %s7 = sld [smem:[#allocation0]]
  $region61: #{tpu_custom_call.1} parent=0
    _
  %s9 = ssub.s32 1, %s7
  %s10 = scalar_select 0, %s9, %s7
  $region1: #{tpu_custom_call.1} parent=0
    #allocation2 [shape = 'u8[32768]{0}', space=vmem, size = 0x8000, scoped, tag = 'output window, operand 0']
    #allocation3 [shape = 's32[2]{0}', space=sflag, size = 0x8, scoped, tag = 'scoped memory for tpu_custom_call.1']
    #allocation4 [shape = 'u8[32768]{0}', space=vmem, size = 0x8000, scoped, tag = 'output window, operand 1']
    #allocation5 [shape = 's32[2]{0}', space=sflag, size = 0x8, scoped, tag = 'scoped memory for tpu_custom_call.1']
    #allocation6 [shape = 'u8[32768]{0}', space=vmem, size = 0x8000, scoped, tag = 'output window, operand 2']
    %11 = vsyncpa [#allocation3], 0
    %s12 = scalar_lea.sflag [#allocation3], 1
    %13 = vsyncpa %s12, 0
    %14 = vsyncpa [#allocation5], 0
    %s15 = scalar_lea.sflag [#allocation5], 1
    %16 = vsyncpa %s15, 0
    loop: start=0, step=1, limit=4
    $region2: #{tpu_custom_call.1} parent=1 // loop_pre_header
      _
    $region3: #{tpu_custom_call.1} parent=1 // loop_header
      %s18 = sphi 0, %s22
      %p19 = scmp.ge.s32.totalorder %s18, 4
      %s28 = sphi 0, %s30
      %s31 = sphi 0, %s28
      %s32 = sphi 0, %s31
      %s48 = sphi 0, %s32
      %s52 = sphi 0, %s52
      %s54 = sphi 0, %s52
      %s55 = sphi 0, %s54
      %s69 = sphi 0, %s55
      %s73 = sphi 0, %s73
      %s75 = sphi 0, %s73
      %s76 = sphi 0, %s75
      %s90 = sphi 0, %s76
      %s96 = sphi 0, %s98
      %s99 = sphi 0, %s96
      %s100 = sphi 0, %s99
      %s116 = sphi 0, %s100
      %s122 = sphi 0, %s124
      %s125 = sphi 0, %s122
      %s126 = sphi 0, %s125
      %s142 = sphi 0, %s126
      %s148 = sphi 0, %s150
      %s151 = sphi 0, %s148
      %s152 = sphi 0, %s151
      %s168 = sphi 0, %s152
    $region4: #{tpu_custom_call.1} parent=1 // loop_header_branch
      %21 = sbr.rel (%p19) target = $region8
    $region5: #{tpu_custom_call.1} parent=1 // loop_body
      %s23 = ssub.s32 %s18, 1
      %s24 = ssub.s32 %s18, 2
      %s25 = sadd.s32 %s18, 1
      %s26 = ssub.s32 %s18, %s25
      %p27 = scmp.eq.s32.totalorder %s26, 0
      %s29 = sadd.s32 %s28, 1
      %s30 = scalar_select %p27, %s28, %s29
      %p33 = pneg %p27
      %p34 = scmp.eq.s32.totalorder %s18, 1
      %p35 = por %p33, %p34
      %p36 = scmp.ne.s32.totalorder %s28, %s31
      %p37 = scmp.eq.s32.totalorder %s18, 0
      %p38 = por %p36, %p37
      %p39 = scmp.ne.s32.totalorder %s28, %s31
      %p40 = scmp.eq.s32.totalorder %s23, 1
      %p41 = por %p39, %p40
      %p42 = scmp.ne.s32.totalorder %s31, %s32
      %p43 = scmp.eq.s32.totalorder %s23, 0
      %p44 = por %p42, %p43
      %p45 = scmp.ne.s32.totalorder %s31, %s32
      %p46 = scmp.eq.s32.totalorder %s24, 1
      %p47 = por %p45, %p46
      %p49 = scmp.ne.s32.totalorder %s32, %s48
      %p50 = scmp.eq.s32.totalorder %s24, 0
      %p51 = por %p49, %p50
      %s53 = sadd.s32 %s52, 1
      %p56 = scmp.eq.s32.totalorder %s18, 1
      %p57 = scmp.ne.s32.totalorder %s52, %s54
      %p58 = scmp.eq.s32.totalorder %s18, 0
      %p59 = por %p57, %p58
      %p60 = scmp.ne.s32.totalorder %s52, %s54
      %p61 = scmp.eq.s32.totalorder %s23, 1
      %p62 = por %p60, %p61
      %p63 = scmp.ne.s32.totalorder %s54, %s55
      %p64 = scmp.eq.s32.totalorder %s23, 0
      %p65 = por %p63, %p64
      %p66 = scmp.ne.s32.totalorder %s54, %s55
      %p67 = scmp.eq.s32.totalorder %s24, 1
      %p68 = por %p66, %p67
      %p70 = scmp.ne.s32.totalorder %s55, %s69
      %p71 = scmp.eq.s32.totalorder %s24, 0
      %p72 = por %p70, %p71
      %s74 = sadd.s32 %s73, 1
      %p77 = scmp.eq.s32.totalorder %s18, 1
      %p78 = scmp.ne.s32.totalorder %s73, %s75
      %p79 = scmp.eq.s32.totalorder %s18, 0
      %p80 = por %p78, %p79
      %p81 = scmp.ne.s32.totalorder %s73, %s75
      %p82 = scmp.eq.s32.totalorder %s23, 1
      %p83 = por %p81, %p82
      %p84 = scmp.ne.s32.totalorder %s75, %s76
      %p85 = scmp.eq.s32.totalorder %s23, 0
      %p86 = por %p84, %p85
      %p87 = scmp.ne.s32.totalorder %s75, %s76
      %p88 = scmp.eq.s32.totalorder %s24, 1
      %p89 = por %p87, %p88
      %p91 = scmp.ne.s32.totalorder %s76, %s90
      %p92 = scmp.eq.s32.totalorder %s24, 0
      %p93 = por %p91, %p92
      %s94 = ssub.s32 %s18, %s25
      %p95 = scmp.eq.s32.totalorder %s94, 0
      %s97 = sadd.s32 %s96, 1
      %s98 = scalar_select %p95, %s96, %s97
      %p101 = pneg %p95
      %p102 = scmp.eq.s32.totalorder %s18, 1
      %p103 = por %p101, %p102
      %p104 = scmp.ne.s32.totalorder %s96, %s99
      %p105 = scmp.eq.s32.totalorder %s18, 0
      %p106 = por %p104, %p105
      %p107 = scmp.ne.s32.totalorder %s96, %s99
      %p108 = scmp.eq.s32.totalorder %s23, 1
      %p109 = por %p107, %p108
      %p110 = scmp.ne.s32.totalorder %s99, %s100
      %p111 = scmp.eq.s32.totalorder %s23, 0
      %p112 = por %p110, %p111
      %p113 = scmp.ne.s32.totalorder %s99, %s100
      %p114 = scmp.eq.s32.totalorder %s24, 1
      %p115 = por %p113, %p114
      %p117 = scmp.ne.s32.totalorder %s100, %s116
      %p118 = scmp.eq.s32.totalorder %s24, 0
      %p119 = por %p117, %p118
      %s120 = ssub.s32 %s18, %s25
      %p121 = scmp.eq.s32.totalorder %s120, 0
      %s123 = sadd.s32 %s122, 1
      %s124 = scalar_select %p121, %s122, %s123
      %p127 = pneg %p121
      %p128 = scmp.eq.s32.totalorder %s18, 1
      %p129 = por %p127, %p128
      %p130 = scmp.ne.s32.totalorder %s122, %s125
      %p131 = scmp.eq.s32.totalorder %s18, 0
      %p132 = por %p130, %p131
      %p133 = scmp.ne.s32.totalorder %s122, %s125
      %p134 = scmp.eq.s32.totalorder %s23, 1
      %p135 = por %p133, %p134
      %p136 = scmp.ne.s32.totalorder %s125, %s126
      %p137 = scmp.eq.s32.totalorder %s23, 0
      %p138 = por %p136, %p137
      %p139 = scmp.ne.s32.totalorder %s125, %s126
      %p140 = scmp.eq.s32.totalorder %s24, 1
      %p141 = por %p139, %p140
      %p143 = scmp.ne.s32.totalorder %s126, %s142
      %p144 = scmp.eq.s32.totalorder %s24, 0
      %p145 = por %p143, %p144
      %s146 = ssub.s32 %s18, %s25
      %p147 = scmp.eq.s32.totalorder %s146, 0
      %s149 = sadd.s32 %s148, 1
      %s150 = scalar_select %p147, %s148, %s149
      %p153 = pneg %p147
      %p154 = scmp.eq.s32.totalorder %s18, 1
      %p155 = por %p153, %p154
      %p156 = scmp.ne.s32.totalorder %s148, %s151
      %p157 = scmp.eq.s32.totalorder %s18, 0
      %p158 = por %p156, %p157
      %p159 = scmp.ne.s32.totalorder %s148, %s151
      %p160 = scmp.eq.s32.totalorder %s23, 1
      %p161 = por %p159, %p160
      %p162 = scmp.ne.s32.totalorder %s151, %s152
      %p163 = scmp.eq.s32.totalorder %s23, 0
      %p164 = por %p162, %p163
      %p165 = scmp.ne.s32.totalorder %s151, %s152
      %p166 = scmp.eq.s32.totalorder %s24, 1
      %p167 = por %p165, %p166
      %p169 = scmp.ne.s32.totalorder %s152, %s168
      %p170 = scmp.eq.s32.totalorder %s24, 0
      %p171 = por %p169, %p170
      %p172 = scmp.le.s32.totalorder 1, %s18
      %p173 = scmp.lt.s32.totalorder %s18, 3
      %p174 = pnand %p172, %p173
      %p175 = pneg %p174
      // Predicated region
      $region9: #{tpu_custom_call.1} parent=5 // pred_check
        _
      $region10: #{tpu_custom_call.1} parent=5 // pred_check_branch
        %177 = sbr.rel (%p174) target = $region12
      $region11: #{tpu_custom_call.1} parent=5 // pred_region
        %s178 = ssub.s32 %s18, 1
        // Predicated region
        $region13: #{tpu_custom_call.1} parent=11 // pred_check
          %p179 = pneg %p65
        $region14: #{tpu_custom_call.1} parent=11 // pred_check_branch
          %181 = sbr.rel (%p179) target = $region16
        $region15: #{tpu_custom_call.1} parent=11 // pred_region
          _
        $region16: #{tpu_custom_call.1} parent=11 // pred_fallthru
          _
        // Predicated region
        $region17: #{tpu_custom_call.1} parent=11 // pred_check
          %p182 = pneg %p86
        $region18: #{tpu_custom_call.1} parent=11 // pred_check_branch
          %184 = sbr.rel (%p182) target = $region20
        $region19: #{tpu_custom_call.1} parent=11 // pred_region
          _
        $region20: #{tpu_custom_call.1} parent=11 // pred_fallthru
          _
      $region12: #{tpu_custom_call.1} parent=5 // pred_fallthru
        _
      %p185 = scmp.lt.s32.totalorder %s18, 2
      // Predicated region
      $region21: #{tpu_custom_call.1} parent=5 // pred_check
        %p186 = pneg %p185
      $region22: #{tpu_custom_call.1} parent=5 // pred_check_branch
        %188 = sbr.rel (%p186) target = $region24
      $region23: #{tpu_custom_call.1} parent=5 // pred_region
        // Predicated region
        $region25: #{tpu_custom_call.1} parent=23 // pred_check
          %p189 = pneg %p38
        $region26: #{tpu_custom_call.1} parent=23 // pred_check_branch
          %191 = sbr.rel (%p189) target = $region28
        $region27: #{tpu_custom_call.1} parent=23 // pred_region
          %p192 = scmp.lt.s32.totalorder %s18, 1
          %s193 = scalar_select %p192, %s18, 1
          %s194 = smul.addr %s193, 20
          %s195 = smul.addr %s194, 4
          %s196 = scalar_lea.vmem %s0, %s195
        $region28: #{tpu_custom_call.1} parent=23 // pred_fallthru
          _
      $region24: #{tpu_custom_call.1} parent=5 // pred_fallthru
        _
      %p197 = scmp.le.s32.totalorder 1, %s18
      %p198 = scmp.lt.s32.totalorder %s18, 3
      %p199 = pnand %p197, %p198
      %p200 = pneg %p199
      // Predicated region
      $region29: #{tpu_custom_call.1} parent=5 // pred_check
        _
      $region30: #{tpu_custom_call.1} parent=5 // pred_check_branch
        %202 = sbr.rel (%p199) target = $region32
      $region31: #{tpu_custom_call.1} parent=5 // pred_region
        %s203 = ssub.s32 %s18, 1
        %p204 = scmp.lt.s32.totalorder %s23, 1
        %s205 = scalar_select %p204, %s23, 1
        %s206 = smul.addr %s205, 20
        %s207 = smul.addr %s206, 4
        %s208 = scalar_lea.vmem %s0, %s207
        %p209 = pneg %p44
        %p210 = pneg %p41
        %p211 = pneg %p65
        %p212 = pneg %p62
        %p213 = pneg %p86
        %p214 = pneg %p83
        %p215 = pneg %p112
        %p216 = pneg %p109
        %s217 = sand.u32 %s99, 1
        %s218 = scalar_lea.sflag [#allocation3], %s217
        %s219 = sand.u32 %s99, 1
        %s220 = smul.addr %s219, 32
        %s221 = scalar_lea.vmem [#allocation2], %s220
        %p222 = pneg %p138
        %p223 = pneg %p135
        %s224 = sand.u32 %s23, 1
        %s225 = scalar_lea.sflag [#allocation5], %s224
        %s226 = sand.u32 %s125, 1
        %s227 = smul.addr %s226, 32
        %s228 = scalar_lea.vmem [#allocation4], %s227
        %p229 = pneg %p164
        %p230 = pneg %p161
        %s231 = sand.u32 %s23, 1
        %s232 = scalar_lea.sflag [#allocation5], %s231
        %s233 = sand.u32 %s151, 1
        %s234 = smul.addr %s233, 32
        %s235 = scalar_lea.vmem [#allocation6], %s234
        %p236 = scmp.lt.s32.totalorder %s23, 1
        %s237 = scalar_select %p236, %s23, 1
        %s238 = smul.addr %s237, 20
        %s239 = smul.addr %s238, 4
        %s240 = scalar_lea.vmem %s0, %s239
        %v242 = vld [vmem:[%s240] sm:$0xf]
        %v243 = vld [vmem:[%s240 + $0x4] sm:$0x1]
        %v244 = vld [vmem:[%s240 + $0x8] sm:$0xf]
        %v245 = vld [vmem:[%s240 + $0xc] sm:$0x1]
        %v246 = vld [vmem:[%s240 + $0x10] sm:$0xf]
        %v247 = vld [vmem:[%s240 + $0x14] sm:$0x1]
        %v248 = vld [vmem:[%s240 + $0x18] sm:$0xf]
        %v249 = vld [vmem:[%s240 + $0x1c] sm:$0x1]
        %v250 = vld [vmem:[%s240 + $0x20] sm:$0xf]
        %v251 = vld [vmem:[%s240 + $0x24] sm:$0x1]
        %v252 = vld [vmem:[%s240 + $0x28] sm:$0xf]
        %v253 = vld [vmem:[%s240 + $0x2c] sm:$0x1]
        %v254 = vld [vmem:[%s240 + $0x30] sm:$0xf]
        %v255 = vld [vmem:[%s240 + $0x34] sm:$0x1]
        %v256 = vld [vmem:[%s240 + $0x38] sm:$0xf]
        %v257 = vld [vmem:[%s240 + $0x3c] sm:$0x1]
        %v258 = vld [vmem:[%s240 + $0x40] sm:$0xf]
        %v259 = vld [vmem:[%s240 + $0x44] sm:$0x1]
        %v260 = vld [vmem:[%s240 + $0x48] sm:$0xf]
        %v261 = vld [vmem:[%s240 + $0x4c] sm:$0x1]
        %v262 = vunpack.c.l.bf16 %v242
        %v263 = vunpack.c.l.bf16 %v243
        %v264 = vunpack.c.l.bf16 %v244
        %v265 = vunpack.c.l.bf16 %v245
        %v266 = vunpack.c.l.bf16 %v246
        %v267 = vunpack.c.l.bf16 %v247
        %v268 = vunpack.c.l.bf16 %v248
        %v269 = vunpack.c.l.bf16 %v249
        %v270 = vunpack.c.l.bf16 %v250
        %v271 = vunpack.c.l.bf16 %v251
        %v272 = vunpack.c.l.bf16 %v252
        %v273 = vunpack.c.l.bf16 %v253
        %v274 = vunpack.c.l.bf16 %v254
        %v275 = vunpack.c.l.bf16 %v255
        %v276 = vunpack.c.l.bf16 %v256
        %v277 = vunpack.c.l.bf16 %v257
        %v278 = vunpack.c.l.bf16 %v258
        %v279 = vunpack.c.l.bf16 %v259
        %v280 = vunpack.c.l.bf16 %v260
        %v281 = vunpack.c.l.bf16 %v261
        %302 = vrot.lane.b32.xlu0 %v262, 64
        %v303 = vpop.permute.xlu0 %302
        %304 = vrot.lane.b32.xlu0 %v263, 64
        %v305 = vpop.permute.xlu0 %304
        %306 = vrot.lane.b32.xlu0 %v264, 64
        %v307 = vpop.permute.xlu0 %306
        %308 = vrot.lane.b32.xlu0 %v265, 64
        %v309 = vpop.permute.xlu0 %308
        %310 = vrot.lane.b32.xlu0 %v266, 64
        %v311 = vpop.permute.xlu0 %310
        %312 = vrot.lane.b32.xlu0 %v267, 64
        %v313 = vpop.permute.xlu0 %312
        %314 = vrot.lane.b32.xlu0 %v268, 64
        %v315 = vpop.permute.xlu0 %314
        %316 = vrot.lane.b32.xlu0 %v269, 64
        %v317 = vpop.permute.xlu0 %316
        %318 = vrot.lane.b32.xlu0 %v270, 64
        %v319 = vpop.permute.xlu0 %318
        %320 = vrot.lane.b32.xlu0 %v271, 64
        %v321 = vpop.permute.xlu0 %320
        %322 = vrot.lane.b32.xlu0 %v272, 64
        %v323 = vpop.permute.xlu0 %322
        %324 = vrot.lane.b32.xlu0 %v273, 64
        %v325 = vpop.permute.xlu0 %324
        %326 = vrot.lane.b32.xlu0 %v274, 64
        %v327 = vpop.permute.xlu0 %326
        %328 = vrot.lane.b32.xlu0 %v275, 64
        %v329 = vpop.permute.xlu0 %328
        %330 = vrot.lane.b32.xlu0 %v276, 64
        %v331 = vpop.permute.xlu0 %330
        %332 = vrot.lane.b32.xlu0 %v277, 64
        %v333 = vpop.permute.xlu0 %332
        %334 = vrot.lane.b32.xlu0 %v278, 64
        %v335 = vpop.permute.xlu0 %334
        %336 = vrot.lane.b32.xlu0 %v279, 64
        %v337 = vpop.permute.xlu0 %336
        %338 = vrot.lane.b32.xlu0 %v280, 64
        %v339 = vpop.permute.xlu0 %338
        %340 = vrot.lane.b32.xlu0 %v281, 64
        %v341 = vpop.permute.xlu0 %340
        %vm362 = vcmask 523264
        %v363 = vsel %vm362, %v262, %v303
        %v364 = vsel %vm362, %v263, %v305
        %v365 = vsel %vm362, %v264, %v307
        %v366 = vsel %vm362, %v265, %v309
        %v367 = vsel %vm362, %v266, %v311
        %v368 = vsel %vm362, %v267, %v313
        %v369 = vsel %vm362, %v268, %v315
        %v370 = vsel %vm362, %v269, %v317
        %v371 = vsel %vm362, %v270, %v319
        %v372 = vsel %vm362, %v271, %v321
        %v373 = vsel %vm362, %v272, %v323
        %v374 = vsel %vm362, %v273, %v325
        %v375 = vsel %vm362, %v274, %v327
        %v376 = vsel %vm362, %v275, %v329
        %v377 = vsel %vm362, %v276, %v331
        %v378 = vsel %vm362, %v277, %v333
        %v379 = vsel %vm362, %v278, %v335
        %v380 = vsel %vm362, %v279, %v337
        %v381 = vsel %vm362, %v280, %v339
        %v382 = vsel %vm362, %v281, %v341
        %v383 = vld [vmem:[%s1] ss:$8 sm:$0x3]
        %v385 = vlaneseq
        %v386 = vshrl.u32 %v385, 7
        %v387 = vsub.s32 0, %v386
        %v388 = vrot.slane %v383, %v387
        %v389 = vlaneseq
        %v390 = vshrl.u32 %v389, 7
        %v391 = vsub.s32 1, %v390
        %v392 = vrot.slane %v383, %v391
        %v395 = vmul.f32 %v363, %v388
        %v396 = vmul.f32 %v262, %v392
        %v397 = vmul.f32 %v365, %v388
        %v398 = vmul.f32 %v264, %v392
        %v399 = vmul.f32 %v367, %v388
        %v400 = vmul.f32 %v266, %v392
        %v401 = vmul.f32 %v369, %v388
        %v402 = vmul.f32 %v268, %v392
        %v403 = vmul.f32 %v371, %v388
        %v404 = vmul.f32 %v270, %v392
        %v405 = vmul.f32 %v373, %v388
        %v406 = vmul.f32 %v272, %v392
        %v407 = vmul.f32 %v375, %v388
        %v408 = vmul.f32 %v274, %v392
        %v409 = vmul.f32 %v377, %v388
        %v410 = vmul.f32 %v276, %v392
        %v411 = vadd.f32 %v395, 0.0
        %v412 = vadd.f32 %v396, 0.0
        %v413 = vadd.f32 %v397, 0.0
        %v414 = vadd.f32 %v398, 0.0
        %v415 = vadd.f32 %v399, 0.0
        %v416 = vadd.f32 %v400, 0.0
        %v417 = vadd.f32 %v401, 0.0
        %v418 = vadd.f32 %v402, 0.0
        %v419 = vadd.f32 %v403, 0.0
        %v420 = vadd.f32 %v404, 0.0
        %v421 = vadd.f32 %v405, 0.0
        %v422 = vadd.f32 %v406, 0.0
        %v423 = vadd.f32 %v407, 0.0
        %v424 = vadd.f32 %v408, 0.0
        %v425 = vadd.f32 %v409, 0.0
        %v426 = vadd.f32 %v410, 0.0
        %s427 = scalar_lea.vmem %s1, 1
        %v428 = vld [vmem:[%s427] ss:$8 sm:$0x3]
        %v430 = vlaneseq
        %v431 = vshrl.u32 %v430, 7
        %v432 = vsub.s32 0, %v431
        %v433 = vrot.slane %v428, %v432
        %v434 = vlaneseq
        %v435 = vshrl.u32 %v434, 7
        %v436 = vsub.s32 1, %v435
        %v437 = vrot.slane %v428, %v436
        %v440 = vmul.f32 %v363, %v433
        %v441 = vmul.f32 %v262, %v437
        %v442 = vmul.f32 %v364, %v433
        %v443 = vmul.f32 %v263, %v437
        %v444 = vmul.f32 %v365, %v433
        %v445 = vmul.f32 %v264, %v437
        %v446 = vmul.f32 %v366, %v433
        %v447 = vmul.f32 %v265, %v437
        %v448 = vmul.f32 %v367, %v433
        %v449 = vmul.f32 %v266, %v437
        %v450 = vmul.f32 %v368, %v433
        %v451 = vmul.f32 %v267, %v437
        %v452 = vmul.f32 %v369, %v433
        %v453 = vmul.f32 %v268, %v437
        %v454 = vmul.f32 %v370, %v433
        %v455 = vmul.f32 %v269, %v437
        %v456 = vmul.f32 %v371, %v433
        %v457 = vmul.f32 %v270, %v437
        %v458 = vmul.f32 %v372, %v433
        %v459 = vmul.f32 %v271, %v437
        %v460 = vmul.f32 %v373, %v433
        %v461 = vmul.f32 %v272, %v437
        %v462 = vmul.f32 %v374, %v433
        %v463 = vmul.f32 %v273, %v437
        %v464 = vmul.f32 %v375, %v433
        %v465 = vmul.f32 %v274, %v437
        %v466 = vmul.f32 %v376, %v433
        %v467 = vmul.f32 %v275, %v437
        %v468 = vmul.f32 %v377, %v433
        %v469 = vmul.f32 %v276, %v437
        %v470 = vmul.f32 %v378, %v433
        %v471 = vmul.f32 %v277, %v437
        %vm504 = vcmask 1046528
        %v505 = vrot.slane %v440, 1
        %v506 = vrot.slane %v442, 1
        %v507 = vsel %vm504, %v505, %v506
        %v508 = vrot.slane %v441, 1
        %v509 = vrot.slane %v443, 1
        %v510 = vsel %vm504, %v508, %v509
        %v511 = vrot.slane %v444, 1
        %v512 = vrot.slane %v446, 1
        %v513 = vsel %vm504, %v511, %v512
        %v514 = vrot.slane %v445, 1
        %v515 = vrot.slane %v447, 1
        %v516 = vsel %vm504, %v514, %v515
        %v517 = vrot.slane %v448, 1
        %v518 = vrot.slane %v450, 1
        %v519 = vsel %vm504, %v517, %v518
        %v520 = vrot.slane %v449, 1
        %v521 = vrot.slane %v451, 1
        %v522 = vsel %vm504, %v520, %v521
        %v523 = vrot.slane %v452, 1
        %v524 = vrot.slane %v454, 1
        %v525 = vsel %vm504, %v523, %v524
        %v526 = vrot.slane %v453, 1
        %v527 = vrot.slane %v455, 1
        %v528 = vsel %vm504, %v526, %v527
        %v529 = vrot.slane %v456, 1
        %v530 = vrot.slane %v458, 1
        %v531 = vsel %vm504, %v529, %v530
        %v532 = vrot.slane %v457, 1
        %v533 = vrot.slane %v459, 1
        %v534 = vsel %vm504, %v532, %v533
        %v535 = vrot.slane %v460, 1
        %v536 = vrot.slane %v462, 1
        %v537 = vsel %vm504, %v535, %v536
        %v538 = vrot.slane %v461, 1
        %v539 = vrot.slane %v463, 1
        %v540 = vsel %vm504, %v538, %v539
        %v541 = vrot.slane %v464, 1
        %v542 = vrot.slane %v466, 1
        %v543 = vsel %vm504, %v541, %v542
        %v544 = vrot.slane %v465, 1
        %v545 = vrot.slane %v467, 1
        %v546 = vsel %vm504, %v544, %v545
        %v547 = vrot.slane %v468, 1
        %v548 = vrot.slane %v470, 1
        %v549 = vsel %vm504, %v547, %v548
        %v550 = vrot.slane %v469, 1
        %v551 = vrot.slane %v471, 1
        %v552 = vsel %vm504, %v550, %v551
        %v569 = vadd.f32 %v411, %v507
        %v570 = vadd.f32 %v412, %v510
        %v571 = vadd.f32 %v413, %v513
        %v572 = vadd.f32 %v414, %v516
        %v573 = vadd.f32 %v415, %v519
        %v574 = vadd.f32 %v416, %v522
        %v575 = vadd.f32 %v417, %v525
        %v576 = vadd.f32 %v418, %v528
        %v577 = vadd.f32 %v419, %v531
        %v578 = vadd.f32 %v420, %v534
        %v579 = vadd.f32 %v421, %v537
        %v580 = vadd.f32 %v422, %v540
        %v581 = vadd.f32 %v423, %v543
        %v582 = vadd.f32 %v424, %v546
        %v583 = vadd.f32 %v425, %v549
        %v584 = vadd.f32 %v426, %v552
        %s585 = scalar_lea.vmem %s1, 2
        %v586 = vld [vmem:[%s585] ss:$8 sm:$0x3]
        %v588 = vlaneseq
        %v589 = vshrl.u32 %v588, 7
        %v590 = vsub.s32 0, %v589
        %v591 = vrot.slane %v586, %v590
        %v592 = vlaneseq
        %v593 = vshrl.u32 %v592, 7
        %v594 = vsub.s32 1, %v593
        %v595 = vrot.slane %v586, %v594
        %v598 = vmul.f32 %v363, %v591
        %v599 = vmul.f32 %v262, %v595
        %v600 = vmul.f32 %v364, %v591
        %v601 = vmul.f32 %v263, %v595
        %v602 = vmul.f32 %v365, %v591
        %v603 = vmul.f32 %v264, %v595
        %v604 = vmul.f32 %v366, %v591
        %v605 = vmul.f32 %v265, %v595
        %v606 = vmul.f32 %v367, %v591
        %v607 = vmul.f32 %v266, %v595
        %v608 = vmul.f32 %v368, %v591
        %v609 = vmul.f32 %v267, %v595
        %v610 = vmul.f32 %v369, %v591
        %v611 = vmul.f32 %v268, %v595
        %v612 = vmul.f32 %v370, %v591
        %v613 = vmul.f32 %v269, %v595
        %v614 = vmul.f32 %v371, %v591
        %v615 = vmul.f32 %v270, %v595
        %v616 = vmul.f32 %v372, %v591
        %v617 = vmul.f32 %v271, %v595
        %v618 = vmul.f32 %v373, %v591
        %v619 = vmul.f32 %v272, %v595
        %v620 = vmul.f32 %v374, %v591
        %v621 = vmul.f32 %v273, %v595
        %v622 = vmul.f32 %v375, %v591
        %v623 = vmul.f32 %v274, %v595
        %v624 = vmul.f32 %v376, %v591
        %v625 = vmul.f32 %v275, %v595
        %v626 = vmul.f32 %v377, %v591
        %v627 = vmul.f32 %v276, %v595
        %v628 = vmul.f32 %v378, %v591
        %v629 = vmul.f32 %v277, %v595
        %vm662 = vcmask 1045504
        %v663 = vrot.slane %v598, 2
        %v664 = vrot.slane %v600, 2
        %v665 = vsel %vm662, %v663, %v664
        %v666 = vrot.slane %v599, 2
        %v667 = vrot.slane %v601, 2
        %v668 = vsel %vm662, %v666, %v667
        %v669 = vrot.slane %v602, 2
        %v670 = vrot.slane %v604, 2
        %v671 = vsel %vm662, %v669, %v670
        %v672 = vrot.slane %v603, 2
        %v673 = vrot.slane %v605, 2
        %v674 = vsel %vm662, %v672, %v673
        %v675 = vrot.slane %v606, 2
        %v676 = vrot.slane %v608, 2
        %v677 = vsel %vm662, %v675, %v676
        %v678 = vrot.slane %v607, 2
        %v679 = vrot.slane %v609, 2
        %v680 = vsel %vm662, %v678, %v679
        %v681 = vrot.slane %v610, 2
        %v682 = vrot.slane %v612, 2
        %v683 = vsel %vm662, %v681, %v682
        %v684 = vrot.slane %v611, 2
        %v685 = vrot.slane %v613, 2
        %v686 = vsel %vm662, %v684, %v685
        %v687 = vrot.slane %v614, 2
        %v688 = vrot.slane %v616, 2
        %v689 = vsel %vm662, %v687, %v688
        %v690 = vrot.slane %v615, 2
        %v691 = vrot.slane %v617, 2
        %v692 = vsel %vm662, %v690, %v691
        %v693 = vrot.slane %v618, 2
        %v694 = vrot.slane %v620, 2
        %v695 = vsel %vm662, %v693, %v694
        %v696 = vrot.slane %v619, 2
        %v697 = vrot.slane %v621, 2
        %v698 = vsel %vm662, %v696, %v697
        %v699 = vrot.slane %v622, 2
        %v700 = vrot.slane %v624, 2
        %v701 = vsel %vm662, %v699, %v700
        %v702 = vrot.slane %v623, 2
        %v703 = vrot.slane %v625, 2
        %v704 = vsel %vm662, %v702, %v703
        %v705 = vrot.slane %v626, 2
        %v706 = vrot.slane %v628, 2
        %v707 = vsel %vm662, %v705, %v706
        %v708 = vrot.slane %v627, 2
        %v709 = vrot.slane %v629, 2
        %v710 = vsel %vm662, %v708, %v709
        %v727 = vadd.f32 %v569, %v665
        %v728 = vadd.f32 %v570, %v668
        %v729 = vadd.f32 %v571, %v671
        %v730 = vadd.f32 %v572, %v674
        %v731 = vadd.f32 %v573, %v677
        %v732 = vadd.f32 %v574, %v680
        %v733 = vadd.f32 %v575, %v683
        %v734 = vadd.f32 %v576, %v686
        %v735 = vadd.f32 %v577, %v689
        %v736 = vadd.f32 %v578, %v692
        %v737 = vadd.f32 %v579, %v695
        %v738 = vadd.f32 %v580, %v698
        %v739 = vadd.f32 %v581, %v701
        %v740 = vadd.f32 %v582, %v704
        %v741 = vadd.f32 %v583, %v707
        %v742 = vadd.f32 %v584, %v710
        %s743 = scalar_lea.vmem %s1, 3
        %v744 = vld [vmem:[%s743] ss:$8 sm:$0x3]
        %v746 = vlaneseq
        %v747 = vshrl.u32 %v746, 7
        %v748 = vsub.s32 0, %v747
        %v749 = vrot.slane %v744, %v748
        %v750 = vlaneseq
        %v751 = vshrl.u32 %v750, 7
        %v752 = vsub.s32 1, %v751
        %v753 = vrot.slane %v744, %v752
        %v756 = vmul.f32 %v365, %v749
        %v757 = vmul.f32 %v264, %v753
        %v758 = vmul.f32 %v367, %v749
        %v759 = vmul.f32 %v266, %v753
        %v760 = vmul.f32 %v369, %v749
        %v761 = vmul.f32 %v268, %v753
        %v762 = vmul.f32 %v371, %v749
        %v763 = vmul.f32 %v270, %v753
        %v764 = vmul.f32 %v373, %v749
        %v765 = vmul.f32 %v272, %v753
        %v766 = vmul.f32 %v375, %v749
        %v767 = vmul.f32 %v274, %v753
        %v768 = vmul.f32 %v377, %v749
        %v769 = vmul.f32 %v276, %v753
        %v770 = vmul.f32 %v379, %v749
        %v771 = vmul.f32 %v278, %v753
        %v772 = vadd.f32 %v727, %v756
        %v773 = vadd.f32 %v728, %v757
        %v774 = vadd.f32 %v729, %v758
        %v775 = vadd.f32 %v730, %v759
        %v776 = vadd.f32 %v731, %v760
        %v777 = vadd.f32 %v732, %v761
        %v778 = vadd.f32 %v733, %v762
        %v779 = vadd.f32 %v734, %v763
        %v780 = vadd.f32 %v735, %v764
        %v781 = vadd.f32 %v736, %v765
        %v782 = vadd.f32 %v737, %v766
        %v783 = vadd.f32 %v738, %v767
        %v784 = vadd.f32 %v739, %v768
        %v785 = vadd.f32 %v740, %v769
        %v786 = vadd.f32 %v741, %v770
        %v787 = vadd.f32 %v742, %v771
        %s788 = scalar_lea.vmem %s1, 4
        %v789 = vld [vmem:[%s788] ss:$8 sm:$0x3]
        %v791 = vlaneseq
        %v792 = vshrl.u32 %v791, 7
        %v793 = vsub.s32 0, %v792
        %v794 = vrot.slane %v789, %v793
        %v795 = vlaneseq
        %v796 = vshrl.u32 %v795, 7
        %v797 = vsub.s32 1, %v796
        %v798 = vrot.slane %v789, %v797
        %v801 = vmul.f32 %v365, %v794
        %v802 = vmul.f32 %v264, %v798
        %v803 = vmul.f32 %v366, %v794
        %v804 = vmul.f32 %v265, %v798
        %v805 = vmul.f32 %v367, %v794
        %v806 = vmul.f32 %v266, %v798
        %v807 = vmul.f32 %v368, %v794
        %v808 = vmul.f32 %v267, %v798
        %v809 = vmul.f32 %v369, %v794
        %v810 = vmul.f32 %v268, %v798
        %v811 = vmul.f32 %v370, %v794
        %v812 = vmul.f32 %v269, %v798
        %v813 = vmul.f32 %v371, %v794
        %v814 = vmul.f32 %v270, %v798
        %v815 = vmul.f32 %v372, %v794
        %v816 = vmul.f32 %v271, %v798
        %v817 = vmul.f32 %v373, %v794
        %v818 = vmul.f32 %v272, %v798
        %v819 = vmul.f32 %v374, %v794
        %v820 = vmul.f32 %v273, %v798
        %v821 = vmul.f32 %v375, %v794
        %v822 = vmul.f32 %v274, %v798
        %v823 = vmul.f32 %v376, %v794
        %v824 = vmul.f32 %v275, %v798
        %v825 = vmul.f32 %v377, %v794
        %v826 = vmul.f32 %v276, %v798
        %v827 = vmul.f32 %v378, %v794
        %v828 = vmul.f32 %v277, %v798
        %v829 = vmul.f32 %v379, %v794
        %v830 = vmul.f32 %v278, %v798
        %v831 = vmul.f32 %v380, %v794
        %v832 = vmul.f32 %v279, %v798
        %v865 = vrot.slane %v801, 1
        %v866 = vrot.slane %v803, 1
        %v867 = vsel %vm504, %v865, %v866
        %v868 = vrot.slane %v802, 1
        %v869 = vrot.slane %v804, 1
        %v870 = vsel %vm504, %v868, %v869
        %v871 = vrot.slane %v805, 1
        %v872 = vrot.slane %v807, 1
        %v873 = vsel %vm504, %v871, %v872
        %v874 = vrot.slane %v806, 1
        %v875 = vrot.slane %v808, 1
        %v876 = vsel %vm504, %v874, %v875
        %v877 = vrot.slane %v809, 1
        %v878 = vrot.slane %v811, 1
        %v879 = vsel %vm504, %v877, %v878
        %v880 = vrot.slane %v810, 1
        %v881 = vrot.slane %v812, 1
        %v882 = vsel %vm504, %v880, %v881
        %v883 = vrot.slane %v813, 1
        %v884 = vrot.slane %v815, 1
        %v885 = vsel %vm504, %v883, %v884
        %v886 = vrot.slane %v814, 1
        %v887 = vrot.slane %v816, 1
        %v888 = vsel %vm504, %v886, %v887
        %v889 = vrot.slane %v817, 1
        %v890 = vrot.slane %v819, 1
        %v891 = vsel %vm504, %v889, %v890
        %v892 = vrot.slane %v818, 1
        %v893 = vrot.slane %v820, 1
        %v894 = vsel %vm504, %v892, %v893
        %v895 = vrot.slane %v821, 1
        %v896 = vrot.slane %v823, 1
        %v897 = vsel %vm504, %v895, %v896
        %v898 = vrot.slane %v822, 1
        %v899 = vrot.slane %v824, 1
        %v900 = vsel %vm504, %v898, %v899
        %v901 = vrot.slane %v825, 1
        %v902 = vrot.slane %v827, 1
        %v903 = vsel %vm504, %v901, %v902
        %v904 = vrot.slane %v826, 1
        %v905 = vrot.slane %v828, 1
        %v906 = vsel %vm504, %v904, %v905
        %v907 = vrot.slane %v829, 1
        %v908 = vrot.slane %v831, 1
        %v909 = vsel %vm504, %v907, %v908
        %v910 = vrot.slane %v830, 1
        %v911 = vrot.slane %v832, 1
        %v912 = vsel %vm504, %v910, %v911
        %v929 = vadd.f32 %v772, %v867
        %v930 = vadd.f32 %v773, %v870
        %v931 = vadd.f32 %v774, %v873
        %v932 = vadd.f32 %v775, %v876
        %v933 = vadd.f32 %v776, %v879
        %v934 = vadd.f32 %v777, %v882
        %v935 = vadd.f32 %v778, %v885
        %v936 = vadd.f32 %v779, %v888
        %v937 = vadd.f32 %v780, %v891
        %v938 = vadd.f32 %v781, %v894
        %v939 = vadd.f32 %v782, %v897
        %v940 = vadd.f32 %v783, %v900
        %v941 = vadd.f32 %v784, %v903
        %v942 = vadd.f32 %v785, %v906
        %v943 = vadd.f32 %v786, %v909
        %v944 = vadd.f32 %v787, %v912
        %s945 = scalar_lea.vmem %s1, 5
        %v946 = vld [vmem:[%s945] ss:$8 sm:$0x3]
        %v948 = vlaneseq
        %v949 = vshrl.u32 %v948, 7
        %v950 = vsub.s32 0, %v949
        %v951 = vrot.slane %v946, %v950
        %v952 = vlaneseq
        %v953 = vshrl.u32 %v952, 7
        %v954 = vsub.s32 1, %v953
        %v955 = vrot.slane %v946, %v954
        %v958 = vmul.f32 %v365, %v951
        %v959 = vmul.f32 %v264, %v955
        %v960 = vmul.f32 %v366, %v951
        %v961 = vmul.f32 %v265, %v955
        %v962 = vmul.f32 %v367, %v951
        %v963 = vmul.f32 %v266, %v955
        %v964 = vmul.f32 %v368, %v951
        %v965 = vmul.f32 %v267, %v955
        %v966 = vmul.f32 %v369, %v951
        %v967 = vmul.f32 %v268, %v955
        %v968 = vmul.f32 %v370, %v951
        %v969 = vmul.f32 %v269, %v955
        %v970 = vmul.f32 %v371, %v951
        %v971 = vmul.f32 %v270, %v955
        %v972 = vmul.f32 %v372, %v951
        %v973 = vmul.f32 %v271, %v955
        %v974 = vmul.f32 %v373, %v951
        %v975 = vmul.f32 %v272, %v955
        %v976 = vmul.f32 %v374, %v951
        %v977 = vmul.f32 %v273, %v955
        %v978 = vmul.f32 %v375, %v951
        %v979 = vmul.f32 %v274, %v955
        %v980 = vmul.f32 %v376, %v951
        %v981 = vmul.f32 %v275, %v955
        %v982 = vmul.f32 %v377, %v951
        %v983 = vmul.f32 %v276, %v955
        %v984 = vmul.f32 %v378, %v951
        %v985 = vmul.f32 %v277, %v955
        %v986 = vmul.f32 %v379, %v951
        %v987 = vmul.f32 %v278, %v955
        %v988 = vmul.f32 %v380, %v951
        %v989 = vmul.f32 %v279, %v955
        %v1022 = vrot.slane %v958, 2
        %v1023 = vrot.slane %v960, 2
        %v1024 = vsel %vm662, %v1022, %v1023
        %v1025 = vrot.slane %v959, 2
        %v1026 = vrot.slane %v961, 2
        %v1027 = vsel %vm662, %v1025, %v1026
        %v1028 = vrot.slane %v962, 2
        %v1029 = vrot.slane %v964, 2
        %v1030 = vsel %vm662, %v1028, %v1029
        %v1031 = vrot.slane %v963, 2
        %v1032 = vrot.slane %v965, 2
        %v1033 = vsel %vm662, %v1031, %v1032
        %v1034 = vrot.slane %v966, 2
        %v1035 = vrot.slane %v968, 2
        %v1036 = vsel %vm662, %v1034, %v1035
        %v1037 = vrot.slane %v967, 2
        %v1038 = vrot.slane %v969, 2
        %v1039 = vsel %vm662, %v1037, %v1038
        %v1040 = vrot.slane %v970, 2
        %v1041 = vrot.slane %v972, 2
        %v1042 = vsel %vm662, %v1040, %v1041
        %v1043 = vrot.slane %v971, 2
        %v1044 = vrot.slane %v973, 2
        %v1045 = vsel %vm662, %v1043, %v1044
        %v1046 = vrot.slane %v974, 2
        %v1047 = vrot.slane %v976, 2
        %v1048 = vsel %vm662, %v1046, %v1047
        %v1049 = vrot.slane %v975, 2
        %v1050 = vrot.slane %v977, 2
        %v1051 = vsel %vm662, %v1049, %v1050
        %v1052 = vrot.slane %v978, 2
        %v1053 = vrot.slane %v980, 2
        %v1054 = vsel %vm662, %v1052, %v1053
        %v1055 = vrot.slane %v979, 2
        %v1056 = vrot.slane %v981, 2
        %v1057 = vsel %vm662, %v1055, %v1056
        %v1058 = vrot.slane %v982, 2
        %v1059 = vrot.slane %v984, 2
        %v1060 = vsel %vm662, %v1058, %v1059
        %v1061 = vrot.slane %v983, 2
        %v1062 = vrot.slane %v985, 2
        %v1063 = vsel %vm662, %v1061, %v1062
        %v1064 = vrot.slane %v986, 2
        %v1065 = vrot.slane %v988, 2
        %v1066 = vsel %vm662, %v1064, %v1065
        %v1067 = vrot.slane %v987, 2
        %v1068 = vrot.slane %v989, 2
        %v1069 = vsel %vm662, %v1067, %v1068
        %v1086 = vadd.f32 %v929, %v1024
        %v1087 = vadd.f32 %v930, %v1027
        %v1088 = vadd.f32 %v931, %v1030
        %v1089 = vadd.f32 %v932, %v1033
        %v1090 = vadd.f32 %v933, %v1036
        %v1091 = vadd.f32 %v934, %v1039
        %v1092 = vadd.f32 %v935, %v1042
        %v1093 = vadd.f32 %v936, %v1045
        %v1094 = vadd.f32 %v937, %v1048
        %v1095 = vadd.f32 %v938, %v1051
        %v1096 = vadd.f32 %v939, %v1054
        %v1097 = vadd.f32 %v940, %v1057
        %v1098 = vadd.f32 %v941, %v1060
        %v1099 = vadd.f32 %v942, %v1063
        %v1100 = vadd.f32 %v943, %v1066
        %v1101 = vadd.f32 %v944, %v1069
        %s1102 = scalar_lea.vmem %s1, 6
        %v1103 = vld [vmem:[%s1102] ss:$8 sm:$0x3]
        %v1105 = vlaneseq
        %v1106 = vshrl.u32 %v1105, 7
        %v1107 = vsub.s32 0, %v1106
        %v1108 = vrot.slane %v1103, %v1107
        %v1109 = vlaneseq
        %v1110 = vshrl.u32 %v1109, 7
        %v1111 = vsub.s32 1, %v1110
        %v1112 = vrot.slane %v1103, %v1111
        %v1115 = vmul.f32 %v367, %v1108
        %v1116 = vmul.f32 %v266, %v1112
        %v1117 = vmul.f32 %v369, %v1108
        %v1118 = vmul.f32 %v268, %v1112
        %v1119 = vmul.f32 %v371, %v1108
        %v1120 = vmul.f32 %v270, %v1112
        %v1121 = vmul.f32 %v373, %v1108
        %v1122 = vmul.f32 %v272, %v1112
        %v1123 = vmul.f32 %v375, %v1108
        %v1124 = vmul.f32 %v274, %v1112
        %v1125 = vmul.f32 %v377, %v1108
        %v1126 = vmul.f32 %v276, %v1112
        %v1127 = vmul.f32 %v379, %v1108
        %v1128 = vmul.f32 %v278, %v1112
        %v1129 = vmul.f32 %v381, %v1108
        %v1130 = vmul.f32 %v280, %v1112
        %v1131 = vadd.f32 %v1086, %v1115
        %v1132 = vadd.f32 %v1087, %v1116
        %v1133 = vadd.f32 %v1088, %v1117
        %v1134 = vadd.f32 %v1089, %v1118
        %v1135 = vadd.f32 %v1090, %v1119
        %v1136 = vadd.f32 %v1091, %v1120
        %v1137 = vadd.f32 %v1092, %v1121
        %v1138 = vadd.f32 %v1093, %v1122
        %v1139 = vadd.f32 %v1094, %v1123
        %v1140 = vadd.f32 %v1095, %v1124
        %v1141 = vadd.f32 %v1096, %v1125
        %v1142 = vadd.f32 %v1097, %v1126
        %v1143 = vadd.f32 %v1098, %v1127
        %v1144 = vadd.f32 %v1099, %v1128
        %v1145 = vadd.f32 %v1100, %v1129
        %v1146 = vadd.f32 %v1101, %v1130
        %s1147 = scalar_lea.vmem %s1, 7
        %v1148 = vld [vmem:[%s1147] ss:$8 sm:$0x3]
        %v1150 = vlaneseq
        %v1151 = vshrl.u32 %v1150, 7
        %v1152 = vsub.s32 0, %v1151
        %v1153 = vrot.slane %v1148, %v1152
        %v1154 = vlaneseq
        %v1155 = vshrl.u32 %v1154, 7
        %v1156 = vsub.s32 1, %v1155
        %v1157 = vrot.slane %v1148, %v1156
        %v1160 = vmul.f32 %v367, %v1153
        %v1161 = vmul.f32 %v266, %v1157
        %v1162 = vmul.f32 %v368, %v1153
        %v1163 = vmul.f32 %v267, %v1157
        %v1164 = vmul.f32 %v369, %v1153
        %v1165 = vmul.f32 %v268, %v1157
        %v1166 = vmul.f32 %v370, %v1153
        %v1167 = vmul.f32 %v269, %v1157
        %v1168 = vmul.f32 %v371, %v1153
        %v1169 = vmul.f32 %v270, %v1157
        %v1170 = vmul.f32 %v372, %v1153
        %v1171 = vmul.f32 %v271, %v1157
        %v1172 = vmul.f32 %v373, %v1153
        %v1173 = vmul.f32 %v272, %v1157
        %v1174 = vmul.f32 %v374, %v1153
        %v1175 = vmul.f32 %v273, %v1157
        %v1176 = vmul.f32 %v375, %v1153
        %v1177 = vmul.f32 %v274, %v1157
        %v1178 = vmul.f32 %v376, %v1153
        %v1179 = vmul.f32 %v275, %v1157
        %v1180 = vmul.f32 %v377, %v1153
        %v1181 = vmul.f32 %v276, %v1157
        %v1182 = vmul.f32 %v378, %v1153
        %v1183 = vmul.f32 %v277, %v1157
        %v1184 = vmul.f32 %v379, %v1153
        %v1185 = vmul.f32 %v278, %v1157
        %v1186 = vmul.f32 %v380, %v1153
        %v1187 = vmul.f32 %v279, %v1157
        %v1188 = vmul.f32 %v381, %v1153
        %v1189 = vmul.f32 %v280, %v1157
        %v1190 = vmul.f32 %v382, %v1153
        %v1191 = vmul.f32 %v281, %v1157
        %v1224 = vrot.slane %v1160, 1
        %v1225 = vrot.slane %v1162, 1
        %v1226 = vsel %vm504, %v1224, %v1225
        %v1227 = vrot.slane %v1161, 1
        %v1228 = vrot.slane %v1163, 1
        %v1229 = vsel %vm504, %v1227, %v1228
        %v1230 = vrot.slane %v1164, 1
        %v1231 = vrot.slane %v1166, 1
        %v1232 = vsel %vm504, %v1230, %v1231
        %v1233 = vrot.slane %v1165, 1
        %v1234 = vrot.slane %v1167, 1
        %v1235 = vsel %vm504, %v1233, %v1234
        %v1236 = vrot.slane %v1168, 1
        %v1237 = vrot.slane %v1170, 1
        %v1238 = vsel %vm504, %v1236, %v1237
        %v1239 = vrot.slane %v1169, 1
        %v1240 = vrot.slane %v1171, 1
        %v1241 = vsel %vm504, %v1239, %v1240
        %v1242 = vrot.slane %v1172, 1
        %v1243 = vrot.slane %v1174, 1
        %v1244 = vsel %vm504, %v1242, %v1243
        %v1245 = vrot.slane %v1173, 1
        %v1246 = vrot.slane %v1175, 1
        %v1247 = vsel %vm504, %v1245, %v1246
        %v1248 = vrot.slane %v1176, 1
        %v1249 = vrot.slane %v1178, 1
        %v1250 = vsel %vm504, %v1248, %v1249
        %v1251 = vrot.slane %v1177, 1
        %v1252 = vrot.slane %v1179, 1
        %v1253 = vsel %vm504, %v1251, %v1252
        %v1254 = vrot.slane %v1180, 1
        %v1255 = vrot.slane %v1182, 1
        %v1256 = vsel %vm504, %v1254, %v1255
        %v1257 = vrot.slane %v1181, 1
        %v1258 = vrot.slane %v1183, 1
        %v1259 = vsel %vm504, %v1257, %v1258
        %v1260 = vrot.slane %v1184, 1
        %v1261 = vrot.slane %v1186, 1
        %v1262 = vsel %vm504, %v1260, %v1261
        %v1263 = vrot.slane %v1185, 1
        %v1264 = vrot.slane %v1187, 1
        %v1265 = vsel %vm504, %v1263, %v1264
        %v1266 = vrot.slane %v1188, 1
        %v1267 = vrot.slane %v1190, 1
        %v1268 = vsel %vm504, %v1266, %v1267
        %v1269 = vrot.slane %v1189, 1
        %v1270 = vrot.slane %v1191, 1
        %v1271 = vsel %vm504, %v1269, %v1270
        %v1288 = vadd.f32 %v1131, %v1226
        %v1289 = vadd.f32 %v1132, %v1229
        %v1290 = vadd.f32 %v1133, %v1232
        %v1291 = vadd.f32 %v1134, %v1235
        %v1292 = vadd.f32 %v1135, %v1238
        %v1293 = vadd.f32 %v1136, %v1241
        %v1294 = vadd.f32 %v1137, %v1244
        %v1295 = vadd.f32 %v1138, %v1247
        %v1296 = vadd.f32 %v1139, %v1250
        %v1297 = vadd.f32 %v1140, %v1253
        %v1298 = vadd.f32 %v1141, %v1256
        %v1299 = vadd.f32 %v1142, %v1259
        %v1300 = vadd.f32 %v1143, %v1262
        %v1301 = vadd.f32 %v1144, %v1265
        %v1302 = vadd.f32 %v1145, %v1268
        %v1303 = vadd.f32 %v1146, %v1271
        %s1304 = scalar_lea.vmem %s1, 16
        %v1305 = vld [vmem:[%s1304] ss:$8 sm:$0x3]
        %v1307 = vlaneseq
        %v1308 = vshrl.u32 %v1307, 7
        %v1309 = vsub.s32 0, %v1308
        %v1310 = vrot.slane %v1305, %v1309
        %v1311 = vlaneseq
        %v1312 = vshrl.u32 %v1311, 7
        %v1313 = vsub.s32 1, %v1312
        %v1314 = vrot.slane %v1305, %v1313
        %v1317 = vmul.f32 %v367, %v1310
        %v1318 = vmul.f32 %v266, %v1314
        %v1319 = vmul.f32 %v368, %v1310
        %v1320 = vmul.f32 %v267, %v1314
        %v1321 = vmul.f32 %v369, %v1310
        %v1322 = vmul.f32 %v268, %v1314
        %v1323 = vmul.f32 %v370, %v1310
        %v1324 = vmul.f32 %v269, %v1314
        %v1325 = vmul.f32 %v371, %v1310
        %v1326 = vmul.f32 %v270, %v1314
        %v1327 = vmul.f32 %v372, %v1310
        %v1328 = vmul.f32 %v271, %v1314
        %v1329 = vmul.f32 %v373, %v1310
        %v1330 = vmul.f32 %v272, %v1314
        %v1331 = vmul.f32 %v374, %v1310
        %v1332 = vmul.f32 %v273, %v1314
        %v1333 = vmul.f32 %v375, %v1310
        %v1334 = vmul.f32 %v274, %v1314
        %v1335 = vmul.f32 %v376, %v1310
        %v1336 = vmul.f32 %v275, %v1314
        %v1337 = vmul.f32 %v377, %v1310
        %v1338 = vmul.f32 %v276, %v1314
        %v1339 = vmul.f32 %v378, %v1310
        %v1340 = vmul.f32 %v277, %v1314
        %v1341 = vmul.f32 %v379, %v1310
        %v1342 = vmul.f32 %v278, %v1314
        %v1343 = vmul.f32 %v380, %v1310
        %v1344 = vmul.f32 %v279, %v1314
        %v1345 = vmul.f32 %v381, %v1310
        %v1346 = vmul.f32 %v280, %v1314
        %v1347 = vmul.f32 %v382, %v1310
        %v1348 = vmul.f32 %v281, %v1314
        %v1381 = vrot.slane %v1317, 2
        %v1382 = vrot.slane %v1319, 2
        %v1383 = vsel %vm662, %v1381, %v1382
        %v1384 = vrot.slane %v1318, 2
        %v1385 = vrot.slane %v1320, 2
        %v1386 = vsel %vm662, %v1384, %v1385
        %v1387 = vrot.slane %v1321, 2
        %v1388 = vrot.slane %v1323, 2
        %v1389 = vsel %vm662, %v1387, %v1388
        %v1390 = vrot.slane %v1322, 2
        %v1391 = vrot.slane %v1324, 2
        %v1392 = vsel %vm662, %v1390, %v1391
        %v1393 = vrot.slane %v1325, 2
        %v1394 = vrot.slane %v1327, 2
        %v1395 = vsel %vm662, %v1393, %v1394
        %v1396 = vrot.slane %v1326, 2
        %v1397 = vrot.slane %v1328, 2
        %v1398 = vsel %vm662, %v1396, %v1397
        %v1399 = vrot.slane %v1329, 2
        %v1400 = vrot.slane %v1331, 2
        %v1401 = vsel %vm662, %v1399, %v1400
        %v1402 = vrot.slane %v1330, 2
        %v1403 = vrot.slane %v1332, 2
        %v1404 = vsel %vm662, %v1402, %v1403
        %v1405 = vrot.slane %v1333, 2
        %v1406 = vrot.slane %v1335, 2
        %v1407 = vsel %vm662, %v1405, %v1406
        %v1408 = vrot.slane %v1334, 2
        %v1409 = vrot.slane %v1336, 2
        %v1410 = vsel %vm662, %v1408, %v1409
        %v1411 = vrot.slane %v1337, 2
        %v1412 = vrot.slane %v1339, 2
        %v1413 = vsel %vm662, %v1411, %v1412
        %v1414 = vrot.slane %v1338, 2
        %v1415 = vrot.slane %v1340, 2
        %v1416 = vsel %vm662, %v1414, %v1415
        %v1417 = vrot.slane %v1341, 2
        %v1418 = vrot.slane %v1343, 2
        %v1419 = vsel %vm662, %v1417, %v1418
        %v1420 = vrot.slane %v1342, 2
        %v1421 = vrot.slane %v1344, 2
        %v1422 = vsel %vm662, %v1420, %v1421
        %v1423 = vrot.slane %v1345, 2
        %v1424 = vrot.slane %v1347, 2
        %v1425 = vsel %vm662, %v1423, %v1424
        %v1426 = vrot.slane %v1346, 2
        %v1427 = vrot.slane %v1348, 2
        %v1428 = vsel %vm662, %v1426, %v1427
        %v1445 = vadd.f32 %v1288, %v1383
        %v1446 = vadd.f32 %v1289, %v1386
        %v1447 = vadd.f32 %v1290, %v1389
        %v1448 = vadd.f32 %v1291, %v1392
        %v1449 = vadd.f32 %v1292, %v1395
        %v1450 = vadd.f32 %v1293, %v1398
        %v1451 = vadd.f32 %v1294, %v1401
        %v1452 = vadd.f32 %v1295, %v1404
        %v1453 = vadd.f32 %v1296, %v1407
        %v1454 = vadd.f32 %v1297, %v1410
        %v1455 = vadd.f32 %v1298, %v1413
        %v1456 = vadd.f32 %v1299, %v1416
        %v1457 = vadd.f32 %v1300, %v1419
        %v1458 = vadd.f32 %v1301, %v1422
        %v1459 = vadd.f32 %v1302, %v1425
        %v1460 = vadd.f32 %v1303, %v1428
        %v1461 = vpack.c.bf16 %v1447, %v1445
        %v1462 = vpack.c.bf16 %v1448, %v1446
        %v1463 = vpack.c.bf16 %v1451, %v1449
        %v1464 = vpack.c.bf16 %v1452, %v1450
        %v1465 = vpack.c.bf16 %v1455, %v1453
        %v1466 = vpack.c.bf16 %v1456, %v1454
        %v1467 = vpack.c.bf16 %v1459, %v1457
        %v1468 = vpack.c.bf16 %v1460, %v1458
        %v1469 = vld [vmem:[%s2] sm:$0xff]
        %v1470 = vld [vmem:[%s2 + $0x8] sm:$0xff]
        %v1471 = vld [vmem:[%s2 + $0x10] sm:$0xff]
        %v1472 = vld [vmem:[%s2 + $0x18] sm:$0xff]
        %v1473 = vld [vmem:[%s2 + $0x20] sm:$0xff]
        %v1474 = vld [vmem:[%s2 + $0x28] sm:$0xff]
        %v1475 = vld [vmem:[%s2 + $0x30] sm:$0xff]
        %v1476 = vld [vmem:[%s2 + $0x38] sm:$0xff]
        %v1477 = vld [vmem:[%s2 + $0x40] sm:$0xff]
        %v1478 = vld [vmem:[%s2 + $0x48] sm:$0xff]
        %v1479 = vld [vmem:[%s2 + $0x50] sm:$0xff]
        %v1480 = vld [vmem:[%s2 + $0x58] sm:$0xff]
        %v1481 = vld [vmem:[%s2 + $0x60] sm:$0xff]
        %v1482 = vld [vmem:[%s2 + $0x68] sm:$0xff]
        %v1483 = vld [vmem:[%s2 + $0x70] sm:$0xff]
        %v1484 = vld [vmem:[%s2 + $0x78] sm:$0xff]
        %v1485 = vld [vmem:[%s2 + $0x80] sm:$0xff]
        %v1486 = vld [vmem:[%s2 + $0x88] sm:$0xff]
        %v1487 = vld [vmem:[%s2 + $0x90] sm:$0xff]
        %v1488 = vld [vmem:[%s2 + $0x98] sm:$0xff]
        %v1489 = vld [vmem:[%s2 + $0xa0] sm:$0xff]
        %v1490 = vld [vmem:[%s2 + $0xa8] sm:$0xff]
        %v1491 = vld [vmem:[%s2 + $0xb0] sm:$0xff]
        %v1492 = vld [vmem:[%s2 + $0xb8] sm:$0xff]
        %v1517 = vunpack.c.l.b16 %v1469
        %v1518 = vunpack.c.h.b16 %v1469
        %v1519 = vunpack.c.l.b16 %v1470
        %v1520 = vunpack.c.h.b16 %v1470
        %v1521 = vunpack.c.l.b16 %v1471
        %v1522 = vunpack.c.h.b16 %v1471
        %v1523 = vunpack.c.l.b16 %v1472
        %v1524 = vunpack.c.h.b16 %v1472
        %v1525 = vunpack.c.l.b16 %v1473
        %v1526 = vunpack.c.h.b16 %v1473
        %v1527 = vunpack.c.l.b16 %v1474
        %v1528 = vunpack.c.h.b16 %v1474
        %v1529 = vunpack.c.l.b16 %v1475
        %v1530 = vunpack.c.h.b16 %v1475
        %v1531 = vunpack.c.l.b16 %v1476
        %v1532 = vunpack.c.h.b16 %v1476
        %v1533 = vunpack.c.l.b16 %v1477
        %v1534 = vunpack.c.h.b16 %v1477
        %v1535 = vunpack.c.l.b16 %v1478
        %v1536 = vunpack.c.h.b16 %v1478
        %v1537 = vunpack.c.l.b16 %v1479
        %v1538 = vunpack.c.h.b16 %v1479
        %v1539 = vunpack.c.l.b16 %v1480
        %v1540 = vunpack.c.h.b16 %v1480
        %v1541 = vunpack.c.l.b16 %v1481
        %v1542 = vunpack.c.h.b16 %v1481
        %v1543 = vunpack.c.l.b16 %v1482
        %v1544 = vunpack.c.h.b16 %v1482
        %v1545 = vunpack.c.l.b16 %v1483
        %v1546 = vunpack.c.h.b16 %v1483
        %v1547 = vunpack.c.l.b16 %v1484
        %v1548 = vunpack.c.h.b16 %v1484
        %v1549 = vunpack.c.l.b16 %v1485
        %v1550 = vunpack.c.h.b16 %v1485
        %v1551 = vunpack.c.l.b16 %v1486
        %v1552 = vunpack.c.h.b16 %v1486
        %v1553 = vunpack.c.l.b16 %v1487
        %v1554 = vunpack.c.h.b16 %v1487
        %v1555 = vunpack.c.l.b16 %v1488
        %v1556 = vunpack.c.h.b16 %v1488
        %v1557 = vunpack.c.l.b16 %v1489
        %v1558 = vunpack.c.h.b16 %v1489
        %v1559 = vunpack.c.l.b16 %v1490
        %v1560 = vunpack.c.h.b16 %v1490
        %v1561 = vunpack.c.l.b16 %v1491
        %v1562 = vunpack.c.h.b16 %v1491
        %v1563 = vunpack.c.l.b16 %v1492
        %v1564 = vunpack.c.h.b16 %v1492
        %v1565 = vpack.c.b16 %v1519, %v1517
        %v1566 = vpack.c.b16 %v1520, %v1518
        %v1567 = vpack.c.b16 %v1523, %v1521
        %v1568 = vpack.c.b16 %v1524, %v1522
        %v1569 = vpack.c.b16 %v1527, %v1525
        %v1570 = vpack.c.b16 %v1528, %v1526
        %v1571 = vpack.c.b16 %v1531, %v1529
        %v1572 = vpack.c.b16 %v1532, %v1530
        %v1573 = vpack.c.b16 %v1535, %v1533
        %v1574 = vpack.c.b16 %v1536, %v1534
        %v1575 = vpack.c.b16 %v1539, %v1537
        %v1576 = vpack.c.b16 %v1540, %v1538
        %v1577 = vpack.c.b16 %v1543, %v1541
        %v1578 = vpack.c.b16 %v1544, %v1542
        %v1579 = vpack.c.b16 %v1547, %v1545
        %v1580 = vpack.c.b16 %v1548, %v1546
        %v1581 = vpack.c.b16 %v1551, %v1549
        %v1582 = vpack.c.b16 %v1552, %v1550
        %v1583 = vpack.c.b16 %v1555, %v1553
        %v1584 = vpack.c.b16 %v1556, %v1554
        %v1585 = vpack.c.b16 %v1559, %v1557
        %v1586 = vpack.c.b16 %v1560, %v1558
        %v1587 = vpack.c.b16 %v1563, %v1561
        %v1588 = vpack.c.b16 %v1564, %v1562
        %v1614 = vsel %vm362, %v1462, 0
        %v1617 = vsel %vm362, %v1464, 0
        %v1620 = vsel %vm362, %v1466, 0
        %v1623 = vsel %vm362, %v1468, 0
        %1625 = vmatprep.subr.bf16.mxu0 %v1566
        %1626 = vmatpush1.bf16.msra.mxu0 %v1565
        %1627 = vmatprep.subr.bf16.mxu0 %v1568
        %1628 = vmatpush1.bf16.msra.mxu0 %v1567
        %1629 = vmatprep.subr.bf16.mxu0 %v1570
        %1630 = vmatpush1.bf16.msra.mxu0 %v1569
        %1631 = vmatprep.subr.bf16.mxu0 %v1572
        %1632 = vmatpush1.bf16.msra.mxu0 %v1571
        %1633 = vmatprep.subr.bf16.mxu0 %v1574
        %1634 = vmatpush1.bf16.msra.mxu0 %v1573
        %1635 = vmatprep.subr.bf16.mxu0 %v1576
        %1636 = vmatpush1.bf16.msra.mxu0 %v1575
        %1637 = vmatprep.subr.bf16.mxu0 %v1578
        %1638 = vmatpush1.bf16.msra.mxu0 %v1577
        %1639 = vmatprep.subr.bf16.mxu0 %v1580
        %1640 = vmatpush1.bf16.msra.mxu0 %v1579
        %1641 = vmatprep.subr.bf16.mxu0 %v1582
        %1642 = vmatpush1.bf16.msra.mxu0 %v1581
        %1643 = vmatprep.subr.bf16.mxu0 %v1584
        %1644 = vmatpush1.bf16.msra.mxu0 %v1583
        %1645 = vmatprep.subr.bf16.mxu0 %v1586
        %1646 = vmatpush1.bf16.msra.mxu0 %v1585
        %1647 = vmatprep.subr.bf16.mxu0 %v1588
        %1648 = vmatpush1.bf16.msra.mxu0 %v1587
        %1649 = vmatprep.subr.bf16.mxu0 0
        %1650 = vmatpush1.bf16.msra.mxu0 0
        %1651 = vmatprep.subr.bf16.mxu0 0
        %1652 = vmatpush1.bf16.msra.mxu0 0
        %1653 = vmatprep.subr.bf16.mxu0 0
        %1654 = vmatpush1.bf16.msra.mxu0 0
        %1655 = vmatprep.subr.bf16.mxu0 0
        %1656 = vmatpush1.bf16.msra.mxu0 0
        %1657 = vmatprep.mubr.bf16.mxu0 %v1614
        %1658 = vmatmul.mubr.bf16.gmra.mrb[0].mxu0 %v1461
        %v1659 = vpop.f32.mrb[0].mxu0
        %v1660 = vadd.f32 0.0, %v1659
        %v1661 = vpop.f32.mrb[0].mxu0
        %v1662 = vadd.f32 0.0, %v1661
        %v1663 = vpop.f32.mrb[0].mxu0
        %v1664 = vadd.f32 0.0, %v1663
        %v1665 = vpop.f32.mrb[0].mxu0
        %v1666 = vadd.f32 0.0, %v1665
        %1667 = vmatprep.mubr.bf16.mxu0 %v1617
        %1668 = vmatmul.mubr.bf16.gmra.mrb[0].mxu0 %v1463
        %v1669 = vpop.f32.mrb[0].mxu0
        %v1670 = vadd.f32 0.0, %v1669
        %v1671 = vpop.f32.mrb[0].mxu0
        %v1672 = vadd.f32 0.0, %v1671
        %v1673 = vpop.f32.mrb[0].mxu0
        %v1674 = vadd.f32 0.0, %v1673
        %v1675 = vpop.f32.mrb[0].mxu0
        %v1676 = vadd.f32 0.0, %v1675
        %1677 = vmatprep.mubr.bf16.mxu0 %v1620
        %1678 = vmatmul.mubr.bf16.gmra.mrb[0].mxu0 %v1465
        %v1679 = vpop.f32.mrb[0].mxu0
        %v1680 = vadd.f32 0.0, %v1679
        %v1681 = vpop.f32.mrb[0].mxu0
        %v1682 = vadd.f32 0.0, %v1681
        %v1683 = vpop.f32.mrb[0].mxu0
        %v1684 = vadd.f32 0.0, %v1683
        %v1685 = vpop.f32.mrb[0].mxu0
        %v1686 = vadd.f32 0.0, %v1685
        %1687 = vmatprep.mubr.bf16.mxu0 %v1623
        %1688 = vmatmul.mubr.bf16.gmra.mrb[0].mxu0 %v1467
        %v1689 = vpop.f32.mrb[0].mxu0
        %v1690 = vadd.f32 0.0, %v1689
        %v1691 = vpop.f32.mrb[0].mxu0
        %v1692 = vadd.f32 0.0, %v1691
        %v1693 = vpop.f32.mrb[0].mxu0
        %v1694 = vadd.f32 0.0, %v1693
        %v1695 = vpop.f32.mrb[0].mxu0
        %v1696 = vadd.f32 0.0, %v1695
        %1697 = vdwg.mxu0
        %v1698 = vpack.c.bf16 %v1664, %v1660
        %v1699 = vpack.c.bf16 %v1674, %v1670
        %v1700 = vpack.c.bf16 %v1684, %v1680
        %v1701 = vpack.c.bf16 %v1694, %v1690
        %v1706 = vunpack.c.l.b16 %v1698
        %v1707 = vunpack.c.h.b16 %v1698
        %v1708 = vunpack.c.l.b16 %v1699
        %v1709 = vunpack.c.h.b16 %v1699
        %v1710 = vunpack.c.l.b16 %v1700
        %v1711 = vunpack.c.h.b16 %v1700
        %v1712 = vunpack.c.l.b16 %v1701
        %v1713 = vunpack.c.h.b16 %v1701
        %v1714 = vpack.c.b16 %v1706, %v1706
        %v1715 = vpack.c.b16 %v1707, %v1707
        %v1716 = vpack.c.b16 %v1708, %v1708
        %v1717 = vpack.c.b16 %v1709, %v1709
        %v1718 = vpack.c.b16 %v1710, %v1710
        %v1719 = vpack.c.b16 %v1711, %v1711
        %v1720 = vpack.c.b16 %v1712, %v1712
        %v1721 = vpack.c.b16 %v1713, %v1713
        %vm1730 = vcmask 519168
        %1731 = vst.msk [vmem:[%s221] sm:$0xf] %vm1730, %v1714
        %1732 = vst.msk [vmem:[%s221 + $0x4] sm:$0xf] %vm1730, %v1715
        %1733 = vst.msk [vmem:[%s221 + $0x8] sm:$0xf] %vm1730, %v1716
        %1734 = vst.msk [vmem:[%s221 + $0xc] sm:$0xf] %vm1730, %v1717
        %1735 = vst.msk [vmem:[%s221 + $0x10] sm:$0xf] %vm1730, %v1718
        %1736 = vst.msk [vmem:[%s221 + $0x14] sm:$0xf] %vm1730, %v1719
        %1737 = vst.msk [vmem:[%s221 + $0x18] sm:$0xf] %vm1730, %v1720
        %1738 = vst.msk [vmem:[%s221 + $0x1c] sm:$0xf] %vm1730, %v1721
        %1739 = vrot.lane.b32.xlu0 %v1714, 64
        %v1740 = vpop.permute.xlu0 %1739
        %1741 = vrot.lane.b32.xlu0 %v1715, 64
        %v1742 = vpop.permute.xlu0 %1741
        %1743 = vrot.lane.b32.xlu0 %v1716, 64
        %v1744 = vpop.permute.xlu0 %1743
        %1745 = vrot.lane.b32.xlu0 %v1717, 64
        %v1746 = vpop.permute.xlu0 %1745
        %1747 = vrot.lane.b32.xlu0 %v1718, 64
        %v1748 = vpop.permute.xlu0 %1747
        %1749 = vrot.lane.b32.xlu0 %v1719, 64
        %v1750 = vpop.permute.xlu0 %1749
        %1751 = vrot.lane.b32.xlu0 %v1720, 64
        %v1752 = vpop.permute.xlu0 %1751
        %1753 = vrot.lane.b32.xlu0 %v1721, 64
        %v1754 = vpop.permute.xlu0 %1753
        %1763 = vst.msk [vmem:[%s228] sm:$0xf] %vm1730, %v1740
        %1764 = vst.msk [vmem:[%s228 + $0x4] sm:$0xf] %vm1730, %v1742
        %1765 = vst.msk [vmem:[%s228 + $0x8] sm:$0xf] %vm1730, %v1744
        %1766 = vst.msk [vmem:[%s228 + $0xc] sm:$0xf] %vm1730, %v1746
        %1767 = vst.msk [vmem:[%s228 + $0x10] sm:$0xf] %vm1730, %v1748
        %1768 = vst.msk [vmem:[%s228 + $0x14] sm:$0xf] %vm1730, %v1750
        %1769 = vst.msk [vmem:[%s228 + $0x18] sm:$0xf] %vm1730, %v1752
        %1770 = vst.msk [vmem:[%s228 + $0x1c] sm:$0xf] %vm1730, %v1754
        %v1771 = vpack.c.bf16 %v1666, %v1662
        %v1772 = vpack.c.bf16 %v1676, %v1672
        %v1773 = vpack.c.bf16 %v1686, %v1682
        %v1774 = vpack.c.bf16 %v1696, %v1692
        %v1779 = vunpack.c.l.b16 %v1771
        %v1780 = vunpack.c.h.b16 %v1771
        %v1781 = vunpack.c.l.b16 %v1772
        %v1782 = vunpack.c.h.b16 %v1772
        %v1783 = vunpack.c.l.b16 %v1773
        %v1784 = vunpack.c.h.b16 %v1773
        %v1785 = vunpack.c.l.b16 %v1774
        %v1786 = vunpack.c.h.b16 %v1774
        %v1787 = vpack.c.b16 %v1779, %v1779
        %v1788 = vpack.c.b16 %v1780, %v1780
        %v1789 = vpack.c.b16 %v1781, %v1781
        %v1790 = vpack.c.b16 %v1782, %v1782
        %v1791 = vpack.c.b16 %v1783, %v1783
        %v1792 = vpack.c.b16 %v1784, %v1784
        %v1793 = vpack.c.b16 %v1785, %v1785
        %v1794 = vpack.c.b16 %v1786, %v1786
        %1803 = vst.msk [vmem:[%s235] sm:$0xf] %vm1730, %v1787
        %1804 = vst.msk [vmem:[%s235 + $0x4] sm:$0xf] %vm1730, %v1788
        %1805 = vst.msk [vmem:[%s235 + $0x8] sm:$0xf] %vm1730, %v1789
        %1806 = vst.msk [vmem:[%s235 + $0xc] sm:$0xf] %vm1730, %v1790
        %1807 = vst.msk [vmem:[%s235 + $0x10] sm:$0xf] %vm1730, %v1791
        %1808 = vst.msk [vmem:[%s235 + $0x14] sm:$0xf] %vm1730, %v1792
        %1809 = vst.msk [vmem:[%s235 + $0x18] sm:$0xf] %vm1730, %v1793
        %1810 = vst.msk [vmem:[%s235 + $0x1c] sm:$0xf] %vm1730, %v1794
        %s1811 = sand.u32 %s99, 1
        %s1812 = scalar_lea.sflag [#allocation3], %s1811
        %s1813 = sand.u32 %s99, 1
        %s1814 = smul.addr %s1813, 32
        %s1815 = scalar_lea.vmem [#allocation2], %s1814
        %s1816 = sand.u32 %s23, 1
        %s1817 = scalar_lea.sflag [#allocation5], %s1816
        %s1818 = sand.u32 %s125, 1
        %s1819 = smul.addr %s1818, 32
        %s1820 = scalar_lea.vmem [#allocation4], %s1819
        %s1821 = sand.u32 %s23, 1
        %s1822 = scalar_lea.sflag [#allocation5], %s1821
        %s1823 = sand.u32 %s151, 1
        %s1824 = smul.addr %s1823, 32
        %s1825 = scalar_lea.vmem [#allocation6], %s1824
        // Predicated region
        $region33: #{tpu_custom_call.1} parent=31 // pred_check
          %p1826 = pneg %p109
        $region34: #{tpu_custom_call.1} parent=31 // pred_check_branch
          %1828 = sbr.rel (%p1826) target = $region36
        $region35: #{tpu_custom_call.1} parent=31 // pred_region
          %s1830 = ssub.s32 512, 512
          %1831 = vsyncadd %s1812, %s1830
          %s1832 = smul.addr %s23, 8
          %s1833 = smul.addr %s1832, 64
          %s1834 = scalar_lea.hbm %s3, %s1833
          %s1835 = sshll.u32 %s1815, 4
          %s1836 = int_to_ptr.vmem [resolvable:$true] %s1835
          %1841 = dma.vmem_to_hbm [thread:$0]  %s1836, 512, %s1834, %s1812, 64, 64, 4
        $region36: #{tpu_custom_call.1} parent=31 // pred_fallthru
          _
        // Predicated region
        $region37: #{tpu_custom_call.1} parent=31 // pred_check
          %p1842 = pneg %p135
        $region38: #{tpu_custom_call.1} parent=31 // pred_check_branch
          %1844 = sbr.rel (%p1842) target = $region40
        $region39: #{tpu_custom_call.1} parent=31 // pred_region
          %s1846 = ssub.s32 512, 512
          %1847 = vsyncadd %s1817, %s1846
          %s1848 = smul.addr %s23, 8
          %s1849 = smul.addr %s1848, 64
          %s1850 = scalar_lea.hbm %s4, %s1849
          %s1851 = sshll.u32 %s1820, 4
          %s1852 = int_to_ptr.vmem [resolvable:$true] %s1851
          %1857 = dma.vmem_to_hbm [thread:$0]  %s1852, 512, %s1850, %s1817, 64, 64, 4
        $region40: #{tpu_custom_call.1} parent=31 // pred_fallthru
          _
        // Predicated region
        $region41: #{tpu_custom_call.1} parent=31 // pred_check
          %p1858 = pneg %p161
        $region42: #{tpu_custom_call.1} parent=31 // pred_check_branch
          %1860 = sbr.rel (%p1858) target = $region44
        $region43: #{tpu_custom_call.1} parent=31 // pred_region
          %s1862 = ssub.s32 512, 512
          %1863 = vsyncadd %s1822, %s1862
          %s1864 = smul.addr %s23, 8
          %s1865 = smul.addr %s1864, 64
          %s1866 = scalar_lea.hbm %s5, %s1865
          %s1867 = sshll.u32 %s1825, 4
          %s1868 = int_to_ptr.vmem [resolvable:$true] %s1867
          %1873 = dma.vmem_to_hbm [thread:$0]  %s1868, 512, %s1866, %s1822, 64, 64, 4
        $region44: #{tpu_custom_call.1} parent=31 // pred_fallthru
          _
      $region32: #{tpu_custom_call.1} parent=5 // pred_fallthru
        _
      %p1874 = scmp.le.s32.totalorder 2, %s18
      // Predicated region
      $region45: #{tpu_custom_call.1} parent=5 // pred_check
        %p1875 = pneg %p1874
      $region46: #{tpu_custom_call.1} parent=5 // pred_check_branch
        %1877 = sbr.rel (%p1875) target = $region48
      $region47: #{tpu_custom_call.1} parent=5 // pred_region
        %s1878 = ssub.s32 %s18, 2
        // Predicated region
        $region49: #{tpu_custom_call.1} parent=47 // pred_check
          %p1879 = pneg %p115
        $region50: #{tpu_custom_call.1} parent=47 // pred_check_branch
          %1881 = sbr.rel (%p1879) target = $region52
        $region51: #{tpu_custom_call.1} parent=47 // pred_region
          %s1882 = sand.u32 %s100, 1
          %s1883 = scalar_lea.sflag [#allocation3], %s1882
          %s1884 = sand.u32 %s100, 1
          %s1885 = smul.addr %s1884, 32
          %s1886 = scalar_lea.vmem [#allocation2], %s1885
          %1887 = dma.done %s1883, 512
        $region52: #{tpu_custom_call.1} parent=47 // pred_fallthru
          _
        // Predicated region
        $region53: #{tpu_custom_call.1} parent=47 // pred_check
          %p1888 = pneg %p141
        $region54: #{tpu_custom_call.1} parent=47 // pred_check_branch
          %1890 = sbr.rel (%p1888) target = $region56
        $region55: #{tpu_custom_call.1} parent=47 // pred_region
          %s1891 = sand.u32 %s24, 1
          %s1892 = scalar_lea.sflag [#allocation5], %s1891
          %s1893 = sand.u32 %s126, 1
          %s1894 = smul.addr %s1893, 32
          %s1895 = scalar_lea.vmem [#allocation4], %s1894
          %1896 = dma.done %s1892, 512
        $region56: #{tpu_custom_call.1} parent=47 // pred_fallthru
          _
        // Predicated region
        $region57: #{tpu_custom_call.1} parent=47 // pred_check
          %p1897 = pneg %p167
        $region58: #{tpu_custom_call.1} parent=47 // pred_check_branch
          %1899 = sbr.rel (%p1897) target = $region60
        $region59: #{tpu_custom_call.1} parent=47 // pred_region
          %s1900 = sand.u32 %s24, 1
          %s1901 = scalar_lea.sflag [#allocation5], %s1900
          %s1902 = sand.u32 %s152, 1
          %s1903 = smul.addr %s1902, 32
          %s1904 = scalar_lea.vmem [#allocation6], %s1903
          %1905 = dma.done %s1901, 512
        $region60: #{tpu_custom_call.1} parent=47 // pred_fallthru
          _
      $region48: #{tpu_custom_call.1} parent=5 // pred_fallthru
        _
    $region6: #{tpu_custom_call.1} parent=1 // loop_footer
      %s22 = sadd.s32 1, %s18
    $region7: #{tpu_custom_call.1} parent=1 // loop_footer_branch
      %17 = sbr.rel target = $region3
    $region8: #{tpu_custom_call.1} parent=1 // loop_exit
      _
    %1906 = vsyncpa [#allocation3], 1
    %s1907 = scalar_lea.sflag [#allocation3], 1
    %1908 = vsyncpa %s1907, 1
    %1909 = vsyncpa [#allocation5], 1
    %s1910 = scalar_lea.sflag [#allocation5], 1
    %1911 = vsyncpa %s1910, 1

</llo_original>
